<compile_context>
chip_gen: v5e
topology: v5e:2x2
jax: 0.10.0
libtpu: 0.0.40
codegen_flags: <defaults>
</compile_context>

<pallas_src>
import functools

import jax
import jax.numpy as jnp
from jax.experimental import pallas as pl
from jax.experimental.pallas import tpu as pltpu


# ----------------------------------------------------------------------------
# Pallas kernel: one grid step == TB (batch, window) slices, shape (TB, N, C).
# ----------------------------------------------------------------------------
def _window_attn_kernel(x_ref, wqkv_ref, bqkv_ref, bm_ref, wproj_ref,
                        bproj_ref, o_ref, *, num_heads, scale):
    TB, N, C = x_ref.shape
    hd = C // num_heads

    # (TB, N, C) -> (TB*N, C); N is a multiple of 8 so this is layout-free.
    x2d = x_ref[...].reshape(TB * N, C).astype(jnp.bfloat16)

    # QKV projection on the MXU: bf16 operands, f32 accumulation.
    qkv = jnp.dot(x2d, wqkv_ref[...],
                  preferred_element_type=jnp.float32) + bqkv_ref[...]  # (TB*N, 3C)

    q = (qkv[:, 0:C] * scale).astype(jnp.bfloat16)
    k = qkv[:, C:2 * C].astype(jnp.bfloat16)
    v = qkv[:, 2 * C:3 * C].astype(jnp.bfloat16)

    head_outs = []
    for h in range(num_heads):                       # static, small unrolled loop
        qh = q[:, h * hd:(h + 1) * hd].reshape(TB, N, hd)
        kh = k[:, h * hd:(h + 1) * hd].reshape(TB, N, hd)
        vh = v[:, h * hd:(h + 1) * hd].reshape(TB, N, hd)

        # batched QK^T over TB windows: (TB, N, N), f32 accumulation.
        s = jnp.einsum('bqd,bkd->bqk', qh, kh,
                       preferred_element_type=jnp.float32)
        # single add: combined (relative-position bias + shift mask), resident.
        s = s + bm_ref[h]

        # numerically-stable softmax in f32; reciprocal goes to the EUP slot.
        s = s - jnp.max(s, axis=-1, keepdims=True)
        p = jnp.exp(s)
        p = p * pl.reciprocal(jnp.sum(p, axis=-1, keepdims=True), approx=True)

        oh = jnp.einsum('bqk,bkd->bqd', p.astype(jnp.bfloat16), vh,
                        preferred_element_type=jnp.float32)          # (TB, N, hd)
        head_outs.append(oh.reshape(TB * N, hd))

    y = jnp.concatenate(head_outs, axis=-1)                          # (TB*N, C)

    # output projection (bf16 operands, f32 accumulation).
    y = jnp.dot(y.astype(jnp.bfloat16), wproj_ref[...],
                preferred_element_type=jnp.float32) + bproj_ref[...]

    # TODO(synk): attn_drop / proj_drop have rate 0.0 (eval) -> identity;
    # training-mode stochastic dropout is not implemented.
    o_ref[...] = y.reshape(TB, N, C).astype(o_ref.dtype)


# ----------------------------------------------------------------------------
# Helpers
# ----------------------------------------------------------------------------
def _choose_tb(B_, nW, target=64):
    """Windows per grid step: a multiple of nW near `target`, and (when
    possible) at least 2 grid steps so both v7x TensorCores get work."""
    tb = max(nW, (target // nW) * nW)
    tb = min(tb, -(-B_ // nW) * nW)
    if B_ >= 2 * nW:
        tb = min(tb, max(nW, (B_ // (2 * nW)) * nW))
    return tb


def _vmem_limit_bytes(TB, N, C, num_heads):
    blk = TB * N * C * 4                                   # one x / out block (f32)
    resident = (num_heads * TB * N * N * 4                 # bias+mask table
                + (3 * C * C + C * C) * 2                  # bf16 weights
                + 4 * C * 4)                               # biases
    inter = TB * N * 3 * C * 4 * 3 + TB * N * N * 4 * 4    # in-kernel temporaries
    est = 4 * blk + resident + inter
    # Cap at 64 MiB so the request is valid on v7x (64 MiB physical VMEM) too;
    # on v5e/v6e this still raises the default scoped limit for larger TB.
    return int(min(max(2 * est, 32 * 1024 * 1024), 64 * 1024 * 1024))


def _relative_position_index(window_size):
    Wh, Ww = window_size
    coords_h = jnp.arange(Wh)
    coords_w = jnp.arange(Ww)
    coords = jnp.stack(jnp.meshgrid(coords_h, coords_w, indexing="ij"))  # (2,Wh,Ww)
    flat = coords.reshape(2, -1)                                         # (2, N)
    rel = flat[:, :, None] - flat[:, None, :]                            # (2, N, N)
    rel = jnp.transpose(rel, (1, 2, 0))                                  # (N, N, 2)
    rel = rel + jnp.array([Wh - 1, Ww - 1])
    rel = rel.at[:, :, 0].multiply(2 * Ww - 1)
    return rel.sum(-1)                                                   # (N, N)


# ----------------------------------------------------------------------------
# Wrapper: parameter plumbing + pallas_call
# ----------------------------------------------------------------------------
def window_attention(x, params, window_size, num_heads, mask=None, tb=None):
    """x: (B_, N, C); mask: (nW, N, N) with 0 / -inf-like values, or None."""
    B_, N, C = x.shape
    assert N == window_size[0] * window_size[1]
    assert C % num_heads == 0
    hd = C // num_heads
    scale = hd ** (-0.5)

    wqkv, bqkv, wproj, bproj, rpb_table = params

    # relative position bias: gather + reshape done in plain-JAX glue (tiny).
    rel_index = _relative_position_index(window_size)                  # (N, N)
    rel_bias = rpb_table[rel_index.reshape(-1)].reshape(N, N, num_heads)
    rel_bias = jnp.transpose(rel_bias, (2, 0, 1)).astype(jnp.float32)  # (H, N, N)

    if mask is None:
        mask_arr = jnp.zeros((1, N, N), dtype=jnp.float32)
    else:
        mask_arr = mask.astype(jnp.float32)
    nW = mask_arr.shape[0]
    assert B_ % nW == 0, "B_ must be a multiple of the number of windows"

    TB = _choose_tb(B_, nW) if tb is None else tb
    assert TB % nW == 0
    grid_n = -(-B_ // TB)
    B_pad = grid_n * TB
    x_p = x if B_pad == B_ else jnp.pad(x, ((0, B_pad - B_), (0, 0), (0, 0)))

    # Pre-combine bias + shift mask and pre-tile to TB windows. Window index is
    # the fastest-varying part of B_, and TB % nW == 0, so position t inside a
    # TB block always maps to window id t % nW -> one static resident table.
    combined = rel_bias[None] + mask_arr[:, None]                      # (nW,H,N,N)
    combined = jnp.tile(combined, (TB // nW, 1, 1, 1))                 # (TB,H,N,N)
    combined = jnp.transpose(combined, (1, 0, 2, 3))                   # (H,TB,N,N)

    wqkv_b = wqkv.astype(jnp.bfloat16)
    wproj_b = wproj.astype(jnp.bfloat16)
    bqkv2 = bqkv.reshape(1, 3 * C).astype(jnp.float32)
    bproj2 = bproj.reshape(1, C).astype(jnp.float32)

    kernel = functools.partial(_window_attn_kernel,
                               num_heads=num_heads, scale=scale)

    out = pl.pallas_call(
        kernel,
        out_shape=jax.ShapeDtypeStruct((B_pad, N, C), x.dtype),
        grid_spec=pltpu.PrefetchScalarGridSpec(
            num_scalar_prefetch=0,
            grid=(grid_n,),
            in_specs=[
                pl.BlockSpec((TB, N, C), lambda b: (b, 0, 0)),             # x
                pl.BlockSpec((C, 3 * C), lambda b: (0, 0)),                # W_qkv
                pl.BlockSpec((1, 3 * C), lambda b: (0, 0)),                # b_qkv
                pl.BlockSpec((num_heads, TB, N, N),
                             lambda b: (0, 0, 0, 0)),                      # bias+mask
                pl.BlockSpec((C, C), lambda b: (0, 0)),                    # W_proj
                pl.BlockSpec((1, C), lambda b: (0, 0)),                    # b_proj
            ],
            out_specs=pl.BlockSpec((TB, N, C), lambda b: (b, 0, 0)),
        ),
        compiler_params=pltpu.CompilerParams(
            dimension_semantics=("parallel",),
            vmem_limit_bytes=_vmem_limit_bytes(TB, N, C, num_heads)),
    )(x_p, wqkv_b, bqkv2, combined, wproj_b, bproj2)

    return out[:B_] if B_pad != B_ else out


# ----------------------------------------------------------------------------
# Pure-JAX reference (mirrors the PyTorch forward exactly, in f32)
# ----------------------------------------------------------------------------
def reference(x, params, window_size, num_heads, mask=None):
    B_, N, C = x.shape
    hd = C // num_heads
    scale = hd ** (-0.5)
    wqkv, bqkv, wproj, bproj, rpb_table = params

    qkv = x @ wqkv + bqkv                                    # (B_, N, 3C)
    qkv = qkv.reshape(B_, N, 3, num_heads, hd).transpose(2, 0, 3, 1, 4)
    q, k, v = qkv[0] * scale, qkv[1], qkv[2]                 # (B_, H, N, hd)
    attn = q @ jnp.swapaxes(k, -2, -1)                       # (B_, H, N, N)

    rel_index = _relative_position_index(window_size)
    rel_bias = rpb_table[rel_index.reshape(-1)].reshape(N, N, num_heads)
    rel_bias = jnp.transpose(rel_bias, (2, 0, 1))            # (H, N, N)
    attn = attn + rel_bias[None]

    if mask is not None:
        nW = mask.shape[0]
        attn = attn.reshape(B_ // nW, nW, num_heads, N, N) + mask[None, :, None]
        attn = attn.reshape(B_, num_heads, N, N)
    attn = jax.nn.softmax(attn, axis=-1)
    y = (attn @ v).transpose(0, 2, 1, 3).reshape(B_, N, C)
    return y @ wproj + bproj


# ----------------------------------------------------------------------------
if __name__ == "__main__":
    # Small shapes consistent with the module:
    dim = 32
    window_size = (4, 4)
    num_heads = 4
    N = window_size[0] * window_size[1]     # 16 tokens per window
    batch = 2
    nW = 4                                  # number of windows per image
    B_ = batch * nW                         # (num_windows * B, N, C)

    key = jax.random.PRNGKey(0)
    kx, k1, k2, k3, k4, k5, km = jax.random.split(key, 7)

    x = jax.random.normal(kx, (B_, N, dim), dtype=jnp.float32)

    # Deterministic parameter init (synthetic; shapes from the module __init__).
    wqkv = jax.random.normal(k1, (dim, 3 * dim), dtype=jnp.float32) * 0.02
    bqkv = jax.random.normal(k2, (3 * dim,), dtype=jnp.float32) * 0.02
    wproj = jax.random.normal(k3, (dim, dim), dtype=jnp.float32) * 0.02
    bproj = jax.random.normal(k4, (dim,), dtype=jnp.float32) * 0.02
    rpb_table = jax.random.normal(
        k5, ((2 * window_size[0] - 1) * (2 * window_size[1] - 1), num_heads),
        dtype=jnp.float32) * 0.02
    params = (wqkv, bqkv, wproj, bproj, rpb_table)

    # Shift-style mask: 0 where allowed, -100.0 where disallowed (nW, N, N).
    mask_bits = jax.random.bernoulli(km, 0.25, (nW, N, N))
    mask = jnp.where(mask_bits, -100.0, 0.0).astype(jnp.float32)
    eye = jnp.eye(N, dtype=bool)[None]
    mask = jnp.where(eye, 0.0, mask)        # keep diagonal unmasked

    out = window_attention(x, params, window_size, num_heads, mask=mask)
    out = jax.block_until_ready(out)

    ref = reference(x, params, window_size, num_heads, mask=mask)
    assert out.shape == (B_, N, dim)
    # bf16 MXU operands + approx reciprocal -> looser tolerance than pure f32.
    assert jnp.allclose(out, ref, atol=2e-2, rtol=2e-2), (
        f"max abs err = {jnp.max(jnp.abs(out - ref))}")

    # Also check the mask=None path.
    out_nm = jax.block_until_ready(
        window_attention(x, params, window_size, num_heads, mask=None))
    ref_nm = reference(x, params, window_size, num_heads, mask=None)
    assert jnp.allclose(out_nm, ref_nm, atol=2e-2, rtol=2e-2), (
        f"max abs err (no mask) = {jnp.max(jnp.abs(out_nm - ref_nm))}")

    print("KERNEL_OK")
</pallas_src>

<mosaic_0001>
module attributes {stable_mosaic.version = 11 : i64} {
  func.func @_window_attn_kernel(%arg0: i32, %arg1: memref<4x16x32xf32, #tpu.memory_space<vmem>>, %arg2: memref<32x96xbf16, #tpu.memory_space<vmem>>, %arg3: memref<1x96xf32, #tpu.memory_space<vmem>>, %arg4: memref<4x4x16x16xf32, #tpu.memory_space<vmem>>, %arg5: memref<32x32xbf16, #tpu.memory_space<vmem>>, %arg6: memref<1x32xf32, #tpu.memory_space<vmem>>, %arg7: memref<4x16x32xf32, #tpu.memory_space<vmem>>) attributes {dimension_semantics = [#tpu.dimension_semantics<parallel>], iteration_bounds = array<i64: 2>, scalar_prefetch = 0 : i64, scratch_operands = 0 : i64, tpu.core_type = #tpu.core_type<tc>, window_params = [{transform_indices = @transform_0, window_bounds = array<i64: 4, 16, 32>}, {pipeline_mode = #tpu.pipeline_mode<synchronous>, transform_indices = @transform_1, window_bounds = array<i64: 32, 96>}, {pipeline_mode = #tpu.pipeline_mode<synchronous>, transform_indices = @transform_2, window_bounds = array<i64: 1, 96>}, {pipeline_mode = #tpu.pipeline_mode<synchronous>, transform_indices = @transform_3, window_bounds = array<i64: 4, 4, 16, 16>}, {pipeline_mode = #tpu.pipeline_mode<synchronous>, transform_indices = @transform_4, window_bounds = array<i64: 32, 32>}, {pipeline_mode = #tpu.pipeline_mode<synchronous>, transform_indices = @transform_5, window_bounds = array<i64: 1, 32>}, {transform_indices = @transform_6, window_bounds = array<i64: 4, 16, 32>}]} {
    %c0 = arith.constant 0 : index
    %c0_0 = arith.constant 0 : index
    %c0_1 = arith.constant 0 : index
    %0 = vector.load %arg1[%c0, %c0_0, %c0_1] : memref<4x16x32xf32, #tpu.memory_space<vmem>>, vector<4x16x32xf32>
    %1 = vector.shape_cast %0 : vector<4x16x32xf32> to vector<64x32xf32>
    %2 = arith.truncf %1 : vector<64x32xf32> to vector<64x32xbf16>
    %c0_2 = arith.constant 0 : index
    %c0_3 = arith.constant 0 : index
    %3 = vector.load %arg2[%c0_2, %c0_3] : memref<32x96xbf16, #tpu.memory_space<vmem>>, vector<32x96xbf16>
    %cst = arith.constant dense<0.000000e+00> : vector<64x96xf32>
    %4 = tpu.matmul %2, %3, %cst {dimension_numbers = #tpu.dot_dimension_numbers<[1], [0], [0], [1], [0, 0, 1, 1], [], []>} : vector<64x32xbf16>, vector<32x96xbf16>, vector<64x96xf32> -> vector<64x96xf32>
    %c0_4 = arith.constant 0 : index
    %c0_5 = arith.constant 0 : index
    %5 = vector.load %arg3[%c0_4, %c0_5] : memref<1x96xf32, #tpu.memory_space<vmem>>, vector<1x96xf32>
    %6 = vector.broadcast %5 : vector<1x96xf32> to vector<64x96xf32>
    %7 = arith.addf %4, %6 : vector<64x96xf32>
    %8 = vector.extract_strided_slice %7 {offsets = [0, 0], sizes = [64, 32], strides = [1, 1]} : vector<64x96xf32> to vector<64x32xf32>
    %cst_6 = arith.constant 0.353553385 : f32
    %9 = vector.broadcast %cst_6 : f32 to vector<64x32xf32>
    %10 = arith.mulf %8, %9 : vector<64x32xf32>
    %11 = arith.truncf %10 : vector<64x32xf32> to vector<64x32xbf16>
    %12 = vector.extract_strided_slice %7 {offsets = [0, 32], sizes = [64, 32], strides = [1, 1]} : vector<64x96xf32> to vector<64x32xf32>
    %13 = arith.truncf %12 : vector<64x32xf32> to vector<64x32xbf16>
    %14 = vector.extract_strided_slice %7 {offsets = [0, 64], sizes = [64, 32], strides = [1, 1]} : vector<64x96xf32> to vector<64x32xf32>
    %15 = arith.truncf %14 : vector<64x32xf32> to vector<64x32xbf16>
    %16 = vector.extract_strided_slice %11 {offsets = [0, 0], sizes = [64, 8], strides = [1, 1]} : vector<64x32xbf16> to vector<64x8xbf16>
    %17 = vector.shape_cast %16 : vector<64x8xbf16> to vector<4x16x8xbf16>
    %18 = vector.extract_strided_slice %13 {offsets = [0, 0], sizes = [64, 8], strides = [1, 1]} : vector<64x32xbf16> to vector<64x8xbf16>
    %19 = vector.shape_cast %18 : vector<64x8xbf16> to vector<4x16x8xbf16>
    %20 = vector.extract_strided_slice %15 {offsets = [0, 0], sizes = [64, 8], strides = [1, 1]} : vector<64x32xbf16> to vector<64x8xbf16>
    %21 = vector.shape_cast %20 : vector<64x8xbf16> to vector<4x16x8xbf16>
    "tpu.trace_start"() <{level = 10 : i32, message = "bqd,bkd->bqk"}> : () -> ()
    %cst_7 = arith.constant dense<0.000000e+00> : vector<4x16x16xf32>
    %22 = tpu.matmul %17, %19, %cst_7 {dimension_numbers = #tpu.dot_dimension_numbers<[2], [2], [1], [1], [0, 0, 0, 1, 1, 1], [0], [0]>} : vector<4x16x8xbf16>, vector<4x16x8xbf16>, vector<4x16x16xf32> -> vector<4x16x16xf32>
    "tpu.trace_stop"() : () -> ()
    %c0_8 = arith.constant 0 : index
    %c0_9 = arith.constant 0 : index
    %c0_10 = arith.constant 0 : index
    %c0_11 = arith.constant 0 : index
    %23 = vector.load %arg4[%c0_8, %c0_9, %c0_10, %c0_11] : memref<4x4x16x16xf32, #tpu.memory_space<vmem>>, vector<1x4x16x16xf32>
    %24 = vector.shape_cast %23 : vector<1x4x16x16xf32> to vector<4x16x16xf32>
    %25 = arith.addf %22, %24 : vector<4x16x16xf32>
    %cst_12 = arith.constant dense<0xFF800000> : vector<4x16xf32>
    %26 = vector.multi_reduction <maximumf>, %25, %cst_12 [2] : vector<4x16x16xf32> to vector<4x16xf32>
    %27 = vector.shape_cast %26 : vector<4x16xf32> to vector<4x16x1xf32>
    %28 = vector.broadcast %27 : vector<4x16x1xf32> to vector<4x16x16xf32>
    %29 = arith.subf %25, %28 : vector<4x16x16xf32>
    %30 = math.exp %29 : vector<4x16x16xf32>
    %cst_13 = arith.constant dense<0.000000e+00> : vector<4x16xf32>
    %31 = vector.multi_reduction <add>, %30, %cst_13 [2] : vector<4x16x16xf32> to vector<4x16xf32>
    %32 = vector.shape_cast %31 : vector<4x16xf32> to vector<4x16x1xf32>
    %33 = tpu.reciprocal %32 {approx = true} : vector<4x16x1xf32> -> vector<4x16x1xf32>
    %34 = vector.broadcast %33 : vector<4x16x1xf32> to vector<4x16x16xf32>
    %35 = arith.mulf %30, %34 : vector<4x16x16xf32>
    %36 = arith.truncf %35 : vector<4x16x16xf32> to vector<4x16x16xbf16>
    "tpu.trace_start"() <{level = 10 : i32, message = "bqk,bkd->bqd"}> : () -> ()
    %cst_14 = arith.constant dense<0.000000e+00> : vector<4x16x8xf32>
    %37 = tpu.matmul %36, %21, %cst_14 {dimension_numbers = #tpu.dot_dimension_numbers<[2], [1], [1], [2], [0, 0, 0, 1, 1, 2], [0], [0]>} : vector<4x16x16xbf16>, vector<4x16x8xbf16>, vector<4x16x8xf32> -> vector<4x16x8xf32>
    "tpu.trace_stop"() : () -> ()
    %38 = vector.shape_cast %37 : vector<4x16x8xf32> to vector<64x8xf32>
    %39 = vector.extract_strided_slice %11 {offsets = [0, 8], sizes = [64, 8], strides = [1, 1]} : vector<64x32xbf16> to vector<64x8xbf16>
    %40 = vector.shape_cast %39 : vector<64x8xbf16> to vector<4x16x8xbf16>
    %41 = vector.extract_strided_slice %13 {offsets = [0, 8], sizes = [64, 8], strides = [1, 1]} : vector<64x32xbf16> to vector<64x8xbf16>
    %42 = vector.shape_cast %41 : vector<64x8xbf16> to vector<4x16x8xbf16>
    %43 = vector.extract_strided_slice %15 {offsets = [0, 8], sizes = [64, 8], strides = [1, 1]} : vector<64x32xbf16> to vector<64x8xbf16>
    %44 = vector.shape_cast %43 : vector<64x8xbf16> to vector<4x16x8xbf16>
    "tpu.trace_start"() <{level = 10 : i32, message = "bqd,bkd->bqk"}> : () -> ()
    %cst_15 = arith.constant dense<0.000000e+00> : vector<4x16x16xf32>
    %45 = tpu.matmul %40, %42, %cst_15 {dimension_numbers = #tpu.dot_dimension_numbers<[2], [2], [1], [1], [0, 0, 0, 1, 1, 1], [0], [0]>} : vector<4x16x8xbf16>, vector<4x16x8xbf16>, vector<4x16x16xf32> -> vector<4x16x16xf32>
    "tpu.trace_stop"() : () -> ()
    %c1 = arith.constant 1 : index
    %c0_16 = arith.constant 0 : index
    %c0_17 = arith.constant 0 : index
    %c0_18 = arith.constant 0 : index
    %46 = vector.load %arg4[%c1, %c0_16, %c0_17, %c0_18] : memref<4x4x16x16xf32, #tpu.memory_space<vmem>>, vector<1x4x16x16xf32>
    %47 = vector.shape_cast %46 : vector<1x4x16x16xf32> to vector<4x16x16xf32>
    %48 = arith.addf %45, %47 : vector<4x16x16xf32>
    %cst_19 = arith.constant dense<0xFF800000> : vector<4x16xf32>
    %49 = vector.multi_reduction <maximumf>, %48, %cst_19 [2] : vector<4x16x16xf32> to vector<4x16xf32>
    %50 = vector.shape_cast %49 : vector<4x16xf32> to vector<4x16x1xf32>
    %51 = vector.broadcast %50 : vector<4x16x1xf32> to vector<4x16x16xf32>
    %52 = arith.subf %48, %51 : vector<4x16x16xf32>
    %53 = math.exp %52 : vector<4x16x16xf32>
    %cst_20 = arith.constant dense<0.000000e+00> : vector<4x16xf32>
    %54 = vector.multi_reduction <add>, %53, %cst_20 [2] : vector<4x16x16xf32> to vector<4x16xf32>
    %55 = vector.shape_cast %54 : vector<4x16xf32> to vector<4x16x1xf32>
    %56 = tpu.reciprocal %55 {approx = true} : vector<4x16x1xf32> -> vector<4x16x1xf32>
    %57 = vector.broadcast %56 : vector<4x16x1xf32> to vector<4x16x16xf32>
    %58 = arith.mulf %53, %57 : vector<4x16x16xf32>
    %59 = arith.truncf %58 : vector<4x16x16xf32> to vector<4x16x16xbf16>
    "tpu.trace_start"() <{level = 10 : i32, message = "bqk,bkd->bqd"}> : () -> ()
    %cst_21 = arith.constant dense<0.000000e+00> : vector<4x16x8xf32>
    %60 = tpu.matmul %59, %44, %cst_21 {dimension_numbers = #tpu.dot_dimension_numbers<[2], [1], [1], [2], [0, 0, 0, 1, 1, 2], [0], [0]>} : vector<4x16x16xbf16>, vector<4x16x8xbf16>, vector<4x16x8xf32> -> vector<4x16x8xf32>
    "tpu.trace_stop"() : () -> ()
    %61 = vector.shape_cast %60 : vector<4x16x8xf32> to vector<64x8xf32>
    %62 = vector.extract_strided_slice %11 {offsets = [0, 16], sizes = [64, 8], strides = [1, 1]} : vector<64x32xbf16> to vector<64x8xbf16>
    %63 = vector.shape_cast %62 : vector<64x8xbf16> to vector<4x16x8xbf16>
    %64 = vector.extract_strided_slice %13 {offsets = [0, 16], sizes = [64, 8], strides = [1, 1]} : vector<64x32xbf16> to vector<64x8xbf16>
    %65 = vector.shape_cast %64 : vector<64x8xbf16> to vector<4x16x8xbf16>
    %66 = vector.extract_strided_slice %15 {offsets = [0, 16], sizes = [64, 8], strides = [1, 1]} : vector<64x32xbf16> to vector<64x8xbf16>
    %67 = vector.shape_cast %66 : vector<64x8xbf16> to vector<4x16x8xbf16>
    "tpu.trace_start"() <{level = 10 : i32, message = "bqd,bkd->bqk"}> : () -> ()
    %cst_22 = arith.constant dense<0.000000e+00> : vector<4x16x16xf32>
    %68 = tpu.matmul %63, %65, %cst_22 {dimension_numbers = #tpu.dot_dimension_numbers<[2], [2], [1], [1], [0, 0, 0, 1, 1, 1], [0], [0]>} : vector<4x16x8xbf16>, vector<4x16x8xbf16>, vector<4x16x16xf32> -> vector<4x16x16xf32>
    "tpu.trace_stop"() : () -> ()
    %c2 = arith.constant 2 : index
    %c0_23 = arith.constant 0 : index
    %c0_24 = arith.constant 0 : index
    %c0_25 = arith.constant 0 : index
    %69 = vector.load %arg4[%c2, %c0_23, %c0_24, %c0_25] : memref<4x4x16x16xf32, #tpu.memory_space<vmem>>, vector<1x4x16x16xf32>
    %70 = vector.shape_cast %69 : vector<1x4x16x16xf32> to vector<4x16x16xf32>
    %71 = arith.addf %68, %70 : vector<4x16x16xf32>
    %cst_26 = arith.constant dense<0xFF800000> : vector<4x16xf32>
    %72 = vector.multi_reduction <maximumf>, %71, %cst_26 [2] : vector<4x16x16xf32> to vector<4x16xf32>
    %73 = vector.shape_cast %72 : vector<4x16xf32> to vector<4x16x1xf32>
    %74 = vector.broadcast %73 : vector<4x16x1xf32> to vector<4x16x16xf32>
    %75 = arith.subf %71, %74 : vector<4x16x16xf32>
    %76 = math.exp %75 : vector<4x16x16xf32>
    %cst_27 = arith.constant dense<0.000000e+00> : vector<4x16xf32>
    %77 = vector.multi_reduction <add>, %76, %cst_27 [2] : vector<4x16x16xf32> to vector<4x16xf32>
    %78 = vector.shape_cast %77 : vector<4x16xf32> to vector<4x16x1xf32>
    %79 = tpu.reciprocal %78 {approx = true} : vector<4x16x1xf32> -> vector<4x16x1xf32>
    %80 = vector.broadcast %79 : vector<4x16x1xf32> to vector<4x16x16xf32>
    %81 = arith.mulf %76, %80 : vector<4x16x16xf32>
    %82 = arith.truncf %81 : vector<4x16x16xf32> to vector<4x16x16xbf16>
    "tpu.trace_start"() <{level = 10 : i32, message = "bqk,bkd->bqd"}> : () -> ()
    %cst_28 = arith.constant dense<0.000000e+00> : vector<4x16x8xf32>
    %83 = tpu.matmul %82, %67, %cst_28 {dimension_numbers = #tpu.dot_dimension_numbers<[2], [1], [1], [2], [0, 0, 0, 1, 1, 2], [0], [0]>} : vector<4x16x16xbf16>, vector<4x16x8xbf16>, vector<4x16x8xf32> -> vector<4x16x8xf32>
    "tpu.trace_stop"() : () -> ()
    %84 = vector.shape_cast %83 : vector<4x16x8xf32> to vector<64x8xf32>
    %85 = vector.extract_strided_slice %11 {offsets = [0, 24], sizes = [64, 8], strides = [1, 1]} : vector<64x32xbf16> to vector<64x8xbf16>
    %86 = vector.shape_cast %85 : vector<64x8xbf16> to vector<4x16x8xbf16>
    %87 = vector.extract_strided_slice %13 {offsets = [0, 24], sizes = [64, 8], strides = [1, 1]} : vector<64x32xbf16> to vector<64x8xbf16>
    %88 = vector.shape_cast %87 : vector<64x8xbf16> to vector<4x16x8xbf16>
    %89 = vector.extract_strided_slice %15 {offsets = [0, 24], sizes = [64, 8], strides = [1, 1]} : vector<64x32xbf16> to vector<64x8xbf16>
    %90 = vector.shape_cast %89 : vector<64x8xbf16> to vector<4x16x8xbf16>
    "tpu.trace_start"() <{level = 10 : i32, message = "bqd,bkd->bqk"}> : () -> ()
    %cst_29 = arith.constant dense<0.000000e+00> : vector<4x16x16xf32>
    %91 = tpu.matmul %86, %88, %cst_29 {dimension_numbers = #tpu.dot_dimension_numbers<[2], [2], [1], [1], [0, 0, 0, 1, 1, 1], [0], [0]>} : vector<4x16x8xbf16>, vector<4x16x8xbf16>, vector<4x16x16xf32> -> vector<4x16x16xf32>
    "tpu.trace_stop"() : () -> ()
    %c3 = arith.constant 3 : index
    %c0_30 = arith.constant 0 : index
    %c0_31 = arith.constant 0 : index
    %c0_32 = arith.constant 0 : index
    %92 = vector.load %arg4[%c3, %c0_30, %c0_31, %c0_32] : memref<4x4x16x16xf32, #tpu.memory_space<vmem>>, vector<1x4x16x16xf32>
    %93 = vector.shape_cast %92 : vector<1x4x16x16xf32> to vector<4x16x16xf32>
    %94 = arith.addf %91, %93 : vector<4x16x16xf32>
    %cst_33 = arith.constant dense<0xFF800000> : vector<4x16xf32>
    %95 = vector.multi_reduction <maximumf>, %94, %cst_33 [2] : vector<4x16x16xf32> to vector<4x16xf32>
    %96 = vector.shape_cast %95 : vector<4x16xf32> to vector<4x16x1xf32>
    %97 = vector.broadcast %96 : vector<4x16x1xf32> to vector<4x16x16xf32>
    %98 = arith.subf %94, %97 : vector<4x16x16xf32>
    %99 = math.exp %98 : vector<4x16x16xf32>
    %cst_34 = arith.constant dense<0.000000e+00> : vector<4x16xf32>
    %100 = vector.multi_reduction <add>, %99, %cst_34 [2] : vector<4x16x16xf32> to vector<4x16xf32>
    %101 = vector.shape_cast %100 : vector<4x16xf32> to vector<4x16x1xf32>
    %102 = tpu.reciprocal %101 {approx = true} : vector<4x16x1xf32> -> vector<4x16x1xf32>
    %103 = vector.broadcast %102 : vector<4x16x1xf32> to vector<4x16x16xf32>
    %104 = arith.mulf %99, %103 : vector<4x16x16xf32>
    %105 = arith.truncf %104 : vector<4x16x16xf32> to vector<4x16x16xbf16>
    "tpu.trace_start"() <{level = 10 : i32, message = "bqk,bkd->bqd"}> : () -> ()
    %cst_35 = arith.constant dense<0.000000e+00> : vector<4x16x8xf32>
    %106 = tpu.matmul %105, %90, %cst_35 {dimension_numbers = #tpu.dot_dimension_numbers<[2], [1], [1], [2], [0, 0, 0, 1, 1, 2], [0], [0]>} : vector<4x16x16xbf16>, vector<4x16x8xbf16>, vector<4x16x8xf32> -> vector<4x16x8xf32>
    "tpu.trace_stop"() : () -> ()
    %107 = vector.shape_cast %106 : vector<4x16x8xf32> to vector<64x8xf32>
    %108 = tpu.concatenate %38, %61, %84, %107 in 1 : vector<64x8xf32>, vector<64x8xf32>, vector<64x8xf32>, vector<64x8xf32> -> vector<64x32xf32>
    %109 = arith.truncf %108 : vector<64x32xf32> to vector<64x32xbf16>
    %c0_36 = arith.constant 0 : index
    %c0_37 = arith.constant 0 : index
    %110 = vector.load %arg5[%c0_36, %c0_37] : memref<32x32xbf16, #tpu.memory_space<vmem>>, vector<32x32xbf16>
    %cst_38 = arith.constant dense<0.000000e+00> : vector<64x32xf32>
    %111 = tpu.matmul %109, %110, %cst_38 {dimension_numbers = #tpu.dot_dimension_numbers<[1], [0], [0], [1], [0, 0, 1, 1], [], []>} : vector<64x32xbf16>, vector<32x32xbf16>, vector<64x32xf32> -> vector<64x32xf32>
    %c0_39 = arith.constant 0 : index
    %c0_40 = arith.constant 0 : index
    %112 = vector.load %arg6[%c0_39, %c0_40] : memref<1x32xf32, #tpu.memory_space<vmem>>, vector<1x32xf32>
    %113 = vector.broadcast %112 : vector<1x32xf32> to vector<64x32xf32>
    %114 = arith.addf %111, %113 : vector<64x32xf32>
    %115 = vector.shape_cast %114 : vector<64x32xf32> to vector<4x16x32xf32>
    %c0_41 = arith.constant 0 : index
    %c0_42 = arith.constant 0 : index
    %c0_43 = arith.constant 0 : index
    %116 = vector.load %arg7[%c0_41, %c0_42, %c0_43] : memref<4x16x32xf32, #tpu.memory_space<vmem>>, vector<4x16x32xf32>
    tpu.vector_store %arg7[%c0_41, %c0_42, %c0_43], %115 {strides = array<i32>} : memref<4x16x32xf32, #tpu.memory_space<vmem>>, vector<4x16x32xf32>,
    return
  }
  func.func @transform_0(%arg0: i32) -> (i32, i32, i32) {
    %c0_i32 = arith.constant 0 : i32
    %c0_i32_0 = arith.constant 0 : i32
    %c0_i32_1 = arith.constant 0 : i32
    return %arg0, %c0_i32, %c0_i32_0 : i32, i32, i32
  }
  func.func @transform_1(%arg0: i32) -> (i32, i32) {
    %c0_i32 = arith.constant 0 : i32
    %c0_i32_0 = arith.constant 0 : i32
    %c0_i32_1 = arith.constant 0 : i32
    return %c0_i32, %c0_i32_0 : i32, i32
  }
  func.func @transform_2(%arg0: i32) -> (i32, i32) {
    %c0_i32 = arith.constant 0 : i32
    %c0_i32_0 = arith.constant 0 : i32
    %c0_i32_1 = arith.constant 0 : i32
    return %c0_i32, %c0_i32_0 : i32, i32
  }
  func.func @transform_3(%arg0: i32) -> (i32, i32, i32, i32) {
    %c0_i32 = arith.constant 0 : i32
    %c0_i32_0 = arith.constant 0 : i32
    %c0_i32_1 = arith.constant 0 : i32
    %c0_i32_2 = arith.constant 0 : i32
    %c0_i32_3 = arith.constant 0 : i32
    return %c0_i32, %c0_i32_0, %c0_i32_1, %c0_i32_2 : i32, i32, i32, i32
  }
  func.func @transform_4(%arg0: i32) -> (i32, i32) {
    %c0_i32 = arith.constant 0 : i32
    %c0_i32_0 = arith.constant 0 : i32
    %c0_i32_1 = arith.constant 0 : i32
    return %c0_i32, %c0_i32_0 : i32, i32
  }
  func.func @transform_5(%arg0: i32) -> (i32, i32) {
    %c0_i32 = arith.constant 0 : i32
    %c0_i32_0 = arith.constant 0 : i32
    %c0_i32_1 = arith.constant 0 : i32
    return %c0_i32, %c0_i32_0 : i32, i32
  }
  func.func @transform_6(%arg0: i32) -> (i32, i32, i32) {
    %c0_i32 = arith.constant 0 : i32
    %c0_i32_0 = arith.constant 0 : i32
    %c0_i32_1 = arith.constant 0 : i32
    return %arg0, %c0_i32, %c0_i32_0 : i32, i32, i32
  }
}

</mosaic_0001>

<llo_original>
// kernel: tpu_custom_call.1
$region0: #{tpu_custom_call.1}
  #allocation0 [shape = 'u32[]', space=smem, size = 0x4, offset = 0x4, fixed_abs, tag = 'smem constant byte address 0x4 - core index']
  #allocation1 [shape = 'u32[72,128]{1,0:T(1,128)}', space=vmem, size = 0x9000, scoped, tag = 'internal scratch']
  %s0 = inlined_call_operand.hbm [shape: f32[8,16,32], index: 0, kind: input, shape index: {}]
  %s1 = inlined_call_operand.hbm [shape: bf16[32,96], index: 1, kind: input, shape index: {}]
  %s2 = inlined_call_operand.vmem [shape: f32[1,96], index: 2, kind: input, shape index: {}]
  %s3 = inlined_call_operand.hbm [shape: f32[4,4,16,16], index: 3, kind: input, shape index: {}]
  %s4 = inlined_call_operand.hbm [shape: bf16[32,32], index: 4, kind: input, shape index: {}]
  %s5 = inlined_call_operand.vmem [shape: f32[1,32], index: 5, kind: input, shape index: {}]
  %s6 = inlined_call_operand.hbm [shape: f32[8,16,32], index: 6, kind: output, shape index: {}]
  %s7 = sld [smem:[#allocation0]]
  $region73: #{tpu_custom_call.1} parent=0
    _
  %s9 = ssub.s32 1, %s7
  %s10 = scalar_select 0, %s9, %s7
  $region1: #{tpu_custom_call.1} parent=0
    #allocation2 [shape = 'u8[65536]{0}', space=vmem, size = 0x10000, scoped, tag = 'input window, operand 0']
    #allocation3 [shape = 's32[2]{0}', space=sflag, size = 0x8, scoped, tag = 'scoped memory for tpu_custom_call.1']
    #allocation4 [shape = 's32[2]{0}', space=sflag, size = 0x8, scoped, tag = 'scoped memory for tpu_custom_call.1']
    #allocation5 [shape = 'u8[8192]{0}', space=vmem, size = 0x2000, scoped, tag = 'input window, operand 1, single buffered']
    #allocation6 [shape = 's32[1]{0}', space=sflag, size = 0x4, scoped, tag = 'scoped memory for tpu_custom_call.1']
    #allocation7 [shape = 'u8[131072]{0}', space=vmem, size = 0x20000, scoped, tag = 'input window, operand 3, single buffered']
    #allocation8 [shape = 'u8[8192]{0}', space=vmem, size = 0x2000, scoped, tag = 'input window, operand 4, single buffered']
    #allocation9 [shape = 's32[1]{0}', space=sflag, size = 0x4, scoped, tag = 'scoped memory for tpu_custom_call.1']
    #allocation10 [shape = 'u8[65536]{0}', space=vmem, size = 0x10000, scoped, tag = 'output window, operand 0']
    %11 = vsyncpa [#allocation3], 0
    %s12 = scalar_lea.sflag [#allocation3], 1
    %13 = vsyncpa %s12, 0
    %14 = vsyncpa [#allocation6], 0
    %15 = vsyncpa [#allocation9], 0
    %16 = vsyncpa [#allocation4], 0
    %s17 = scalar_lea.sflag [#allocation4], 1
    %18 = vsyncpa %s17, 0
    loop: start=0, step=1, limit=4
    $region2: #{tpu_custom_call.1} parent=1 // loop_pre_header
      _
    $region3: #{tpu_custom_call.1} parent=1 // loop_header
      %s20 = sphi 0, %s24
      %p21 = scmp.ge.s32.totalorder %s20, 4
      %s30 = sphi 0, %s32
      %s33 = sphi 0, %s30
      %s34 = sphi 0, %s33
      %s50 = sphi 0, %s34
      %s54 = sphi 0, %s54
      %s56 = sphi 0, %s54
      %s57 = sphi 0, %s56
      %s71 = sphi 0, %s57
      %s75 = sphi 0, %s75
      %s77 = sphi 0, %s75
      %s78 = sphi 0, %s77
      %s92 = sphi 0, %s78
      %s96 = sphi 0, %s96
      %s98 = sphi 0, %s96
      %s99 = sphi 0, %s98
      %s113 = sphi 0, %s99
      %s117 = sphi 0, %s117
      %s119 = sphi 0, %s117
      %s120 = sphi 0, %s119
      %s134 = sphi 0, %s120
      %s138 = sphi 0, %s138
      %s140 = sphi 0, %s138
      %s141 = sphi 0, %s140
      %s155 = sphi 0, %s141
      %s161 = sphi 0, %s163
      %s164 = sphi 0, %s161
      %s165 = sphi 0, %s164
      %s181 = sphi 0, %s165
    $region4: #{tpu_custom_call.1} parent=1 // loop_header_branch
      %23 = sbr.rel (%p21) target = $region8
    $region5: #{tpu_custom_call.1} parent=1 // loop_body
      %s25 = ssub.s32 %s20, 1
      %s26 = ssub.s32 %s20, 2
      %s27 = sadd.s32 %s20, 1
      %s28 = ssub.s32 %s20, %s27
      %p29 = scmp.eq.s32.totalorder %s28, 0
      %s31 = sadd.s32 %s30, 1
      %s32 = scalar_select %p29, %s30, %s31
      %p35 = pneg %p29
      %p36 = scmp.eq.s32.totalorder %s20, 1
      %p37 = por %p35, %p36
      %p38 = scmp.ne.s32.totalorder %s30, %s33
      %p39 = scmp.eq.s32.totalorder %s20, 0
      %p40 = por %p38, %p39
      %p41 = scmp.ne.s32.totalorder %s30, %s33
      %p42 = scmp.eq.s32.totalorder %s25, 1
      %p43 = por %p41, %p42
      %p44 = scmp.ne.s32.totalorder %s33, %s34
      %p45 = scmp.eq.s32.totalorder %s25, 0
      %p46 = por %p44, %p45
      %p47 = scmp.ne.s32.totalorder %s33, %s34
      %p48 = scmp.eq.s32.totalorder %s26, 1
      %p49 = por %p47, %p48
      %p51 = scmp.ne.s32.totalorder %s34, %s50
      %p52 = scmp.eq.s32.totalorder %s26, 0
      %p53 = por %p51, %p52
      %s55 = sadd.s32 %s54, 1
      %p58 = scmp.eq.s32.totalorder %s20, 1
      %p59 = scmp.ne.s32.totalorder %s54, %s56
      %p60 = scmp.eq.s32.totalorder %s20, 0
      %p61 = por %p59, %p60
      %p62 = scmp.ne.s32.totalorder %s54, %s56
      %p63 = scmp.eq.s32.totalorder %s25, 1
      %p64 = por %p62, %p63
      %p65 = scmp.ne.s32.totalorder %s56, %s57
      %p66 = scmp.eq.s32.totalorder %s25, 0
      %p67 = por %p65, %p66
      %p68 = scmp.ne.s32.totalorder %s56, %s57
      %p69 = scmp.eq.s32.totalorder %s26, 1
      %p70 = por %p68, %p69
      %p72 = scmp.ne.s32.totalorder %s57, %s71
      %p73 = scmp.eq.s32.totalorder %s26, 0
      %p74 = por %p72, %p73
      %s76 = sadd.s32 %s75, 1
      %p79 = scmp.eq.s32.totalorder %s20, 1
      %p80 = scmp.ne.s32.totalorder %s75, %s77
      %p81 = scmp.eq.s32.totalorder %s20, 0
      %p82 = por %p80, %p81
      %p83 = scmp.ne.s32.totalorder %s75, %s77
      %p84 = scmp.eq.s32.totalorder %s25, 1
      %p85 = por %p83, %p84
      %p86 = scmp.ne.s32.totalorder %s77, %s78
      %p87 = scmp.eq.s32.totalorder %s25, 0
      %p88 = por %p86, %p87
      %p89 = scmp.ne.s32.totalorder %s77, %s78
      %p90 = scmp.eq.s32.totalorder %s26, 1
      %p91 = por %p89, %p90
      %p93 = scmp.ne.s32.totalorder %s78, %s92
      %p94 = scmp.eq.s32.totalorder %s26, 0
      %p95 = por %p93, %p94
      %s97 = sadd.s32 %s96, 1
      %p100 = scmp.eq.s32.totalorder %s20, 1
      %p101 = scmp.ne.s32.totalorder %s96, %s98
      %p102 = scmp.eq.s32.totalorder %s20, 0
      %p103 = por %p101, %p102
      %p104 = scmp.ne.s32.totalorder %s96, %s98
      %p105 = scmp.eq.s32.totalorder %s25, 1
      %p106 = por %p104, %p105
      %p107 = scmp.ne.s32.totalorder %s98, %s99
      %p108 = scmp.eq.s32.totalorder %s25, 0
      %p109 = por %p107, %p108
      %p110 = scmp.ne.s32.totalorder %s98, %s99
      %p111 = scmp.eq.s32.totalorder %s26, 1
      %p112 = por %p110, %p111
      %p114 = scmp.ne.s32.totalorder %s99, %s113
      %p115 = scmp.eq.s32.totalorder %s26, 0
      %p116 = por %p114, %p115
      %s118 = sadd.s32 %s117, 1
      %p121 = scmp.eq.s32.totalorder %s20, 1
      %p122 = scmp.ne.s32.totalorder %s117, %s119
      %p123 = scmp.eq.s32.totalorder %s20, 0
      %p124 = por %p122, %p123
      %p125 = scmp.ne.s32.totalorder %s117, %s119
      %p126 = scmp.eq.s32.totalorder %s25, 1
      %p127 = por %p125, %p126
      %p128 = scmp.ne.s32.totalorder %s119, %s120
      %p129 = scmp.eq.s32.totalorder %s25, 0
      %p130 = por %p128, %p129
      %p131 = scmp.ne.s32.totalorder %s119, %s120
      %p132 = scmp.eq.s32.totalorder %s26, 1
      %p133 = por %p131, %p132
      %p135 = scmp.ne.s32.totalorder %s120, %s134
      %p136 = scmp.eq.s32.totalorder %s26, 0
      %p137 = por %p135, %p136
      %s139 = sadd.s32 %s138, 1
      %p142 = scmp.eq.s32.totalorder %s20, 1
      %p143 = scmp.ne.s32.totalorder %s138, %s140
      %p144 = scmp.eq.s32.totalorder %s20, 0
      %p145 = por %p143, %p144
      %p146 = scmp.ne.s32.totalorder %s138, %s140
      %p147 = scmp.eq.s32.totalorder %s25, 1
      %p148 = por %p146, %p147
      %p149 = scmp.ne.s32.totalorder %s140, %s141
      %p150 = scmp.eq.s32.totalorder %s25, 0
      %p151 = por %p149, %p150
      %p152 = scmp.ne.s32.totalorder %s140, %s141
      %p153 = scmp.eq.s32.totalorder %s26, 1
      %p154 = por %p152, %p153
      %p156 = scmp.ne.s32.totalorder %s141, %s155
      %p157 = scmp.eq.s32.totalorder %s26, 0
      %p158 = por %p156, %p157
      %s159 = ssub.s32 %s20, %s27
      %p160 = scmp.eq.s32.totalorder %s159, 0
      %s162 = sadd.s32 %s161, 1
      %s163 = scalar_select %p160, %s161, %s162
      %p166 = pneg %p160
      %p167 = scmp.eq.s32.totalorder %s20, 1
      %p168 = por %p166, %p167
      %p169 = scmp.ne.s32.totalorder %s161, %s164
      %p170 = scmp.eq.s32.totalorder %s20, 0
      %p171 = por %p169, %p170
      %p172 = scmp.ne.s32.totalorder %s161, %s164
      %p173 = scmp.eq.s32.totalorder %s25, 1
      %p174 = por %p172, %p173
      %p175 = scmp.ne.s32.totalorder %s164, %s165
      %p176 = scmp.eq.s32.totalorder %s25, 0
      %p177 = por %p175, %p176
      %p178 = scmp.ne.s32.totalorder %s164, %s165
      %p179 = scmp.eq.s32.totalorder %s26, 1
      %p180 = por %p178, %p179
      %p182 = scmp.ne.s32.totalorder %s165, %s181
      %p183 = scmp.eq.s32.totalorder %s26, 0
      %p184 = por %p182, %p183
      %p185 = scmp.le.s32.totalorder 1, %s20
      %p186 = scmp.lt.s32.totalorder %s20, 3
      %p187 = pnand %p185, %p186
      %p188 = pneg %p187
      // Predicated region
      $region9: #{tpu_custom_call.1} parent=5 // pred_check
        _
      $region10: #{tpu_custom_call.1} parent=5 // pred_check_branch
        %190 = sbr.rel (%p187) target = $region12
      $region11: #{tpu_custom_call.1} parent=5 // pred_region
        %s191 = ssub.s32 %s20, 1
        // Predicated region
        $region13: #{tpu_custom_call.1} parent=11 // pred_check
          %p192 = pneg %p67
        $region14: #{tpu_custom_call.1} parent=11 // pred_check_branch
          %194 = sbr.rel (%p192) target = $region16
        $region15: #{tpu_custom_call.1} parent=11 // pred_region
          %196 = vsyncadd [#allocation6], 0
          %s197 = sshll.u32 %s1, 4
          %s198 = int_to_ptr.hbm [resolvable:$true] %s197
          %s199 = sshll.u32 [#allocation5], 4
          %s200 = int_to_ptr.vmem [resolvable:$true] %s199
          %205 = dma.hbm_to_vmem [thread:$0]  %s198, 256, %s200, [#allocation6], 64, 64, 4
        $region16: #{tpu_custom_call.1} parent=11 // pred_fallthru
          _
        // Predicated region
        $region17: #{tpu_custom_call.1} parent=11 // pred_check
          %p206 = pneg %p88
        $region18: #{tpu_custom_call.1} parent=11 // pred_check_branch
          %208 = sbr.rel (%p206) target = $region20
        $region19: #{tpu_custom_call.1} parent=11 // pred_region
          _
        $region20: #{tpu_custom_call.1} parent=11 // pred_fallthru
          _
        // Predicated region
        $region21: #{tpu_custom_call.1} parent=11 // pred_check
          %p209 = pneg %p109
        $region22: #{tpu_custom_call.1} parent=11 // pred_check_branch
          %211 = sbr.rel (%p209) target = $region24
        $region23: #{tpu_custom_call.1} parent=11 // pred_region
          %213 = vsyncadd [#allocation6], 0
          %s214 = sshll.u32 %s3, 4
          %s215 = int_to_ptr.hbm [resolvable:$true] %s214
          %s216 = sshll.u32 [#allocation7], 4
          %s217 = int_to_ptr.vmem [resolvable:$true] %s216
          %222 = dma.hbm_to_vmem [thread:$0]  %s215, 4096, %s217, [#allocation6], 128, 128, 8
        $region24: #{tpu_custom_call.1} parent=11 // pred_fallthru
          _
        // Predicated region
        $region25: #{tpu_custom_call.1} parent=11 // pred_check
          %p223 = pneg %p130
        $region26: #{tpu_custom_call.1} parent=11 // pred_check_branch
          %225 = sbr.rel (%p223) target = $region28
        $region27: #{tpu_custom_call.1} parent=11 // pred_region
          %227 = vsyncadd [#allocation9], 0
          %s228 = sshll.u32 %s4, 4
          %s229 = int_to_ptr.hbm [resolvable:$true] %s228
          %s230 = sshll.u32 [#allocation8], 4
          %s231 = int_to_ptr.vmem [resolvable:$true] %s230
          %236 = dma.hbm_to_vmem [thread:$0]  %s229, 256, %s231, [#allocation9], 64, 64, 4
        $region28: #{tpu_custom_call.1} parent=11 // pred_fallthru
          _
        // Predicated region
        $region29: #{tpu_custom_call.1} parent=11 // pred_check
          %p237 = pneg %p151
        $region30: #{tpu_custom_call.1} parent=11 // pred_check_branch
          %239 = sbr.rel (%p237) target = $region32
        $region31: #{tpu_custom_call.1} parent=11 // pred_region
          _
        $region32: #{tpu_custom_call.1} parent=11 // pred_fallthru
          _
      $region12: #{tpu_custom_call.1} parent=5 // pred_fallthru
        _
      %p240 = scmp.lt.s32.totalorder %s20, 2
      // Predicated region
      $region33: #{tpu_custom_call.1} parent=5 // pred_check
        %p241 = pneg %p240
      $region34: #{tpu_custom_call.1} parent=5 // pred_check_branch
        %243 = sbr.rel (%p241) target = $region36
      $region35: #{tpu_custom_call.1} parent=5 // pred_region
        // Predicated region
        $region37: #{tpu_custom_call.1} parent=35 // pred_check
          %p244 = pneg %p40
        $region38: #{tpu_custom_call.1} parent=35 // pred_check_branch
          %246 = sbr.rel (%p244) target = $region40
        $region39: #{tpu_custom_call.1} parent=35 // pred_region
          %s247 = sand.u32 %s30, 1
          %s248 = scalar_lea.sflag [#allocation3], %s247
          %s249 = sand.u32 %s30, 1
          %s250 = smul.addr %s249, 64
          %s251 = scalar_lea.vmem [#allocation2], %s250
          %s252 = smul.u32 4, %s20
          %254 = vsyncadd %s248, 0
          %s255 = smul.addr %s252, 2
          %s256 = smul.addr %s255, 8
          %s257 = scalar_lea.hbm %s0, %s256
          %s258 = sshll.u32 %s257, 4
          %s259 = int_to_ptr.hbm [resolvable:$true] %s258
          %s260 = sshll.u32 %s251, 4
          %s261 = int_to_ptr.vmem [resolvable:$true] %s260
          %266 = dma.hbm_to_vmem [thread:$0]  %s259, 1024, %s261, %s248, 128, 128, 8
        $region40: #{tpu_custom_call.1} parent=35 // pred_fallthru
          _
      $region36: #{tpu_custom_call.1} parent=5 // pred_fallthru
        _
      %p267 = scmp.le.s32.totalorder 1, %s20
      %p268 = scmp.lt.s32.totalorder %s20, 3
      %p269 = pnand %p267, %p268
      %p270 = pneg %p269
      // Predicated region
      $region41: #{tpu_custom_call.1} parent=5 // pred_check
        _
      $region42: #{tpu_custom_call.1} parent=5 // pred_check_branch
        %272 = sbr.rel (%p269) target = $region44
      $region43: #{tpu_custom_call.1} parent=5 // pred_region
        %s273 = ssub.s32 %s20, 1
        %s274 = sand.u32 %s33, 1
        %s275 = scalar_lea.sflag [#allocation3], %s274
        %s276 = sand.u32 %s33, 1
        %s277 = smul.addr %s276, 64
        %s278 = scalar_lea.vmem [#allocation2], %s277
        // Predicated region
        $region45: #{tpu_custom_call.1} parent=43 // pred_check
          %p279 = pneg %p46
        $region46: #{tpu_custom_call.1} parent=43 // pred_check_branch
          %281 = sbr.rel (%p279) target = $region48
        $region47: #{tpu_custom_call.1} parent=43 // pred_region
          %283 = dma.done %s275, 1024
        $region48: #{tpu_custom_call.1} parent=43 // pred_fallthru
          _
        // Predicated region
        $region49: #{tpu_custom_call.1} parent=43 // pred_check
          %p284 = pneg %p67
        $region50: #{tpu_custom_call.1} parent=43 // pred_check_branch
          %286 = sbr.rel (%p284) target = $region52
        $region51: #{tpu_custom_call.1} parent=43 // pred_region
          %288 = dma.done [#allocation6], 256
        $region52: #{tpu_custom_call.1} parent=43 // pred_fallthru
          _
        // Predicated region
        $region53: #{tpu_custom_call.1} parent=43 // pred_check
          %p289 = pneg %p109
        $region54: #{tpu_custom_call.1} parent=43 // pred_check_branch
          %291 = sbr.rel (%p289) target = $region56
        $region55: #{tpu_custom_call.1} parent=43 // pred_region
          %293 = dma.done [#allocation6], 4096
        $region56: #{tpu_custom_call.1} parent=43 // pred_fallthru
          _
        // Predicated region
        $region57: #{tpu_custom_call.1} parent=43 // pred_check
          %p294 = pneg %p130
        $region58: #{tpu_custom_call.1} parent=43 // pred_check_branch
          %296 = sbr.rel (%p294) target = $region60
        $region59: #{tpu_custom_call.1} parent=43 // pred_region
          %298 = dma.done [#allocation9], 256
        $region60: #{tpu_custom_call.1} parent=43 // pred_fallthru
          _
        %s299 = sand.u32 %s33, 1
        %s300 = scalar_lea.sflag [#allocation3], %s299
        %s301 = sand.u32 %s33, 1
        %s302 = smul.addr %s301, 64
        %s303 = scalar_lea.vmem [#allocation2], %s302
        %p304 = pneg %p46
        %p305 = pneg %p43
        %p306 = pneg %p67
        %p307 = pneg %p64
        %p308 = pneg %p88
        %p309 = pneg %p85
        %p310 = pneg %p109
        %p311 = pneg %p106
        %p312 = pneg %p130
        %p313 = pneg %p127
        %p314 = pneg %p151
        %p315 = pneg %p148
        %p316 = pneg %p177
        %p317 = pneg %p174
        %s318 = sand.u32 %s164, 1
        %s319 = scalar_lea.sflag [#allocation4], %s318
        %s320 = sand.u32 %s164, 1
        %s321 = smul.addr %s320, 64
        %s322 = scalar_lea.vmem [#allocation10], %s321
        %s323 = smul.u32 4, %s25
        %s324 = smul.u32 4, %s25
        %v326 = vld [vmem:[%s278] sm:$0xff]
        %v327 = vld [vmem:[%s278 + $0x8] sm:$0xff]
        %v328 = vld [vmem:[%s278 + $0x10] sm:$0xff]
        %v329 = vld [vmem:[%s278 + $0x18] sm:$0xff]
        %v330 = vld [vmem:[%s278 + $0x20] sm:$0xff]
        %v331 = vld [vmem:[%s278 + $0x28] sm:$0xff]
        %v332 = vld [vmem:[%s278 + $0x30] sm:$0xff]
        %v333 = vld [vmem:[%s278 + $0x38] sm:$0xff]
        %v334 = vpack.c.bf16 %v327, %v326
        %v335 = vpack.c.bf16 %v329, %v328
        %v336 = vpack.c.bf16 %v331, %v330
        %v337 = vpack.c.bf16 %v333, %v332
        %v338 = vld [vmem:[#allocation5] sm:$0xf]
        %v339 = vld [vmem:[#allocation5 + $0x4] sm:$0xf]
        %v340 = vld [vmem:[#allocation5 + $0x8] sm:$0xf]
        %v341 = vld [vmem:[#allocation5 + $0xc] sm:$0xf]
        %v342 = vld [vmem:[%s2] sm:$0x1]
        %v344 = vperm.slane %v342, 0
        %v350 = vunpack.c.l.b16 %v338
        %v351 = vunpack.c.l.b16 %v339
        %v352 = vunpack.c.l.b16 %v340
        %v353 = vunpack.c.l.b16 %v341
        %v354 = vpack.c.b16 %v351, %v350
        %v355 = vpack.c.b16 %v353, %v352
        %vm358 = vcmask 261120
        %v360 = vsel %vm358, %v334, 0
        %v363 = vsel %vm358, %v335, 0
        %v366 = vsel %vm358, %v336, 0
        %v369 = vsel %vm358, %v337, 0
        %371 = vmatpush.bf16.msra.mxu0 0
        %372 = vmatpush.bf16.msra.mxu0 0
        %373 = vmatpush.bf16.msra.mxu0 0
        %374 = vmatpush.bf16.msra.mxu0 0
        %375 = vmatpush.bf16.msra.mxu0 0
        %376 = vmatpush.bf16.msra.mxu0 0
        %377 = vmatpush.bf16.msra.mxu0 %v355
        %378 = vmatpush.bf16.msra.mxu0 %v354
        %379 = vmatmul.bf16.gmra.mxu0 %v360
        %v380 = vpop.f32.mrf.mxu0
        %v381 = vadd.f32 %v344, %v380
        %v382 = vpop.f32.mrf.mxu0
        %v383 = vadd.f32 %v344, %v382
        %384 = vmatmul.bf16.gmra.mxu0 %v363
        %v385 = vpop.f32.mrf.mxu0
        %v386 = vadd.f32 %v344, %v385
        %v387 = vpop.f32.mrf.mxu0
        %v388 = vadd.f32 %v344, %v387
        %389 = vmatmul.bf16.gmra.mxu0 %v366
        %v390 = vpop.f32.mrf.mxu0
        %v391 = vadd.f32 %v344, %v390
        %v392 = vpop.f32.mrf.mxu0
        %v393 = vadd.f32 %v344, %v392
        %394 = vmatmul.bf16.gmra.mxu0 %v369
        %v395 = vpop.f32.mrf.mxu0
        %v396 = vadd.f32 %v344, %v395
        %v397 = vpop.f32.mrf.mxu0
        %v398 = vadd.f32 %v344, %v397
        %399 = vdwg.mxu0
        %v400 = vmul.f32 %v381, 0.35355338
        %v401 = vmul.f32 %v383, 0.35355338
        %v402 = vmul.f32 %v386, 0.35355338
        %v403 = vmul.f32 %v388, 0.35355338
        %v404 = vmul.f32 %v391, 0.35355338
        %v405 = vmul.f32 %v393, 0.35355338
        %v406 = vmul.f32 %v396, 0.35355338
        %v407 = vmul.f32 %v398, 0.35355338
        %v408 = vpack.c.bf16 %v400, %v400
        %v409 = vpack.c.bf16 %v401, %v401
        %v410 = vpack.c.bf16 %v402, %v402
        %v411 = vpack.c.bf16 %v403, %v403
        %v412 = vpack.c.bf16 %v404, %v404
        %v413 = vpack.c.bf16 %v405, %v405
        %v414 = vpack.c.bf16 %v406, %v406
        %v415 = vpack.c.bf16 %v407, %v407
        %v416 = vpack.c.bf16 %v381, %v381
        %v417 = vpack.c.bf16 %v383, %v383
        %v418 = vpack.c.bf16 %v386, %v386
        %v419 = vpack.c.bf16 %v388, %v388
        %v420 = vpack.c.bf16 %v391, %v391
        %v421 = vpack.c.bf16 %v393, %v393
        %v422 = vpack.c.bf16 %v396, %v396
        %v423 = vpack.c.bf16 %v398, %v398
        %v424 = vld [vmem:[#allocation7] sm:$0xff]
        %v425 = vld [vmem:[#allocation7 + $0x8] sm:$0xff]
        %v426 = vld [vmem:[#allocation7 + $0x10] sm:$0xff]
        %v427 = vld [vmem:[#allocation7 + $0x18] sm:$0xff]
        %v428 = vld [vmem:[#allocation7 + $0x20] sm:$0xff]
        %v429 = vld [vmem:[#allocation7 + $0x28] sm:$0xff]
        %v430 = vld [vmem:[#allocation7 + $0x30] sm:$0xff]
        %v431 = vld [vmem:[#allocation7 + $0x38] sm:$0xff]
        %v434 = vunpack.c.l.b16 %v408
        %v435 = vunpack.c.l.b16 %v409
        %v436 = vpack.c.b16 %v435, %v434
        %v439 = vunpack.c.l.b16 %v416
        %v440 = vunpack.c.l.b16 %v417
        %v441 = vpack.c.b16 %v440, %v439
        %442 = vrot.lane.b32.xlu0 %v441, 96
        %v443 = vpop.permute.xlu0 %442
        %vm444 = vcmask 64512
        %v446 = vsel %vm444, %v436, 0
        %v449 = vsel %vm444, %v443, 0
        %451 = vmatpush.bf16.xpose.msra.mxu0 0
        %452 = vmatpush.bf16.xpose.msra.mxu0 0
        %453 = vmatpush.bf16.xpose.msra.mxu0 0
        %454 = vmatpush.bf16.xpose.msra.mxu0 0
        %455 = vmatpush.bf16.xpose.msra.mxu0 0
        %456 = vmatpush.bf16.xpose.msra.mxu0 0
        %457 = vmatpush.bf16.xpose.msra.mxu0 0
        %458 = vmatpush.bf16.xpose.msra.mxu0 %v449
        %459 = vmatmul.bf16.gmra.mxu0 %v446
        %v460 = vpop.f32.mrf.mxu0
        %v461 = vadd.f32 %v424, %v460
        %v462 = vpop.f32.mrf.mxu0
        %v463 = vadd.f32 %v425, %v462
        %464 = vdwg.mxu0
        %v467 = vunpack.c.l.b16 %v410
        %v468 = vunpack.c.l.b16 %v411
        %v469 = vpack.c.b16 %v468, %v467
        %v472 = vunpack.c.l.b16 %v418
        %v473 = vunpack.c.l.b16 %v419
        %v474 = vpack.c.b16 %v473, %v472
        %475 = vrot.lane.b32.xlu0 %v474, 96
        %v476 = vpop.permute.xlu0 %475
        %v478 = vsel %vm444, %v469, 0
        %v481 = vsel %vm444, %v476, 0
        %483 = vmatpush.bf16.xpose.msra.mxu0 0
        %484 = vmatpush.bf16.xpose.msra.mxu0 0
        %485 = vmatpush.bf16.xpose.msra.mxu0 0
        %486 = vmatpush.bf16.xpose.msra.mxu0 0
        %487 = vmatpush.bf16.xpose.msra.mxu0 0
        %488 = vmatpush.bf16.xpose.msra.mxu0 0
        %489 = vmatpush.bf16.xpose.msra.mxu0 0
        %490 = vmatpush.bf16.xpose.msra.mxu0 %v481
        %491 = vmatmul.bf16.gmra.mxu0 %v478
        %v492 = vpop.f32.mrf.mxu0
        %v493 = vadd.f32 %v426, %v492
        %v494 = vpop.f32.mrf.mxu0
        %v495 = vadd.f32 %v427, %v494
        %496 = vdwg.mxu0
        %v499 = vunpack.c.l.b16 %v412
        %v500 = vunpack.c.l.b16 %v413
        %v501 = vpack.c.b16 %v500, %v499
        %v504 = vunpack.c.l.b16 %v420
        %v505 = vunpack.c.l.b16 %v421
        %v506 = vpack.c.b16 %v505, %v504
        %507 = vrot.lane.b32.xlu0 %v506, 96
        %v508 = vpop.permute.xlu0 %507
        %v510 = vsel %vm444, %v501, 0
        %v513 = vsel %vm444, %v508, 0
        %515 = vmatpush.bf16.xpose.msra.mxu0 0
        %516 = vmatpush.bf16.xpose.msra.mxu0 0
        %517 = vmatpush.bf16.xpose.msra.mxu0 0
        %518 = vmatpush.bf16.xpose.msra.mxu0 0
        %519 = vmatpush.bf16.xpose.msra.mxu0 0
        %520 = vmatpush.bf16.xpose.msra.mxu0 0
        %521 = vmatpush.bf16.xpose.msra.mxu0 0
        %522 = vmatpush.bf16.xpose.msra.mxu0 %v513
        %523 = vmatmul.bf16.gmra.mxu0 %v510
        %v524 = vpop.f32.mrf.mxu0
        %v525 = vadd.f32 %v428, %v524
        %v526 = vpop.f32.mrf.mxu0
        %v527 = vadd.f32 %v429, %v526
        %528 = vdwg.mxu0
        %v531 = vunpack.c.l.b16 %v414
        %v532 = vunpack.c.l.b16 %v415
        %v533 = vpack.c.b16 %v532, %v531
        %v536 = vunpack.c.l.b16 %v422
        %v537 = vunpack.c.l.b16 %v423
        %v538 = vpack.c.b16 %v537, %v536
        %539 = vrot.lane.b32.xlu0 %v538, 96
        %v540 = vpop.permute.xlu0 %539
        %v542 = vsel %vm444, %v533, 0
        %v545 = vsel %vm444, %v540, 0
        %547 = vmatpush.bf16.xpose.msra.mxu0 0
        %548 = vmatpush.bf16.xpose.msra.mxu0 0
        %549 = vmatpush.bf16.xpose.msra.mxu0 0
        %550 = vmatpush.bf16.xpose.msra.mxu0 0
        %551 = vmatpush.bf16.xpose.msra.mxu0 0
        %552 = vmatpush.bf16.xpose.msra.mxu0 0
        %553 = vmatpush.bf16.xpose.msra.mxu0 0
        %554 = vmatpush.bf16.xpose.msra.mxu0 %v545
        %555 = vmatmul.bf16.gmra.mxu0 %v542
        %v556 = vpop.f32.mrf.mxu0
        %v557 = vadd.f32 %v430, %v556
        %v558 = vpop.f32.mrf.mxu0
        %v559 = vadd.f32 %v431, %v558
        %560 = vdwg.mxu0
        %vm561 = vcmask 130048
        %v562 = vsel %vm561, %v461, -inf
        %563 = vmax.xlane.f32.xlu0 %v562
        %v564 = vpop.xlane.xlu0 %563
        %v565 = vsel %vm561, %v463, -inf
        %566 = vmax.xlane.f32.xlu0 %v565
        %v567 = vpop.xlane.xlu0 %566
        %v568 = vsel %vm561, %v493, -inf
        %569 = vmax.xlane.f32.xlu0 %v568
        %v570 = vpop.xlane.xlu0 %569
        %v571 = vsel %vm561, %v495, -inf
        %572 = vmax.xlane.f32.xlu0 %v571
        %v573 = vpop.xlane.xlu0 %572
        %v574 = vsel %vm561, %v525, -inf
        %575 = vmax.xlane.f32.xlu0 %v574
        %v576 = vpop.xlane.xlu0 %575
        %v577 = vsel %vm561, %v527, -inf
        %578 = vmax.xlane.f32.xlu0 %v577
        %v579 = vpop.xlane.xlu0 %578
        %v580 = vsel %vm561, %v557, -inf
        %581 = vmax.xlane.f32.xlu0 %v580
        %v582 = vpop.xlane.xlu0 %581
        %v583 = vsel %vm561, %v559, -inf
        %584 = vmax.xlane.f32.xlu0 %v583
        %v585 = vpop.xlane.xlu0 %584
        %v586 = vsub.f32 %v461, %v564
        %v587 = vsub.f32 %v463, %v567
        %v588 = vsub.f32 %v493, %v570
        %v589 = vsub.f32 %v495, %v573
        %v590 = vsub.f32 %v525, %v576
        %v591 = vsub.f32 %v527, %v579
        %v592 = vsub.f32 %v557, %v582
        %v593 = vsub.f32 %v559, %v585
        %v594 = vmul.f32 %v586, 1.442695
        %v595 = vpow.pop %v594
        %v596 = vmul.f32 %v587, 1.442695
        %v597 = vpow.pop %v596
        %v598 = vmul.f32 %v588, 1.442695
        %v599 = vpow.pop %v598
        %v600 = vmul.f32 %v589, 1.442695
        %v601 = vpow.pop %v600
        %v602 = vmul.f32 %v590, 1.442695
        %v603 = vpow.pop %v602
        %v604 = vmul.f32 %v591, 1.442695
        %v605 = vpow.pop %v604
        %v606 = vmul.f32 %v592, 1.442695
        %v607 = vpow.pop %v606
        %v608 = vmul.f32 %v593, 1.442695
        %v609 = vpow.pop %v608
        %v610 = vsel %vm561, %v595, 0.0
        %611 = vadd.xlane.f32.xlu0 %v610
        %v612 = vpop.xlane.xlu0 %611
        %v613 = vsel %vm561, %v597, 0.0
        %614 = vadd.xlane.f32.xlu0 %v613
        %v615 = vpop.xlane.xlu0 %614
        %v616 = vsel %vm561, %v599, 0.0
        %617 = vadd.xlane.f32.xlu0 %v616
        %v618 = vpop.xlane.xlu0 %617
        %v619 = vsel %vm561, %v601, 0.0
        %620 = vadd.xlane.f32.xlu0 %v619
        %v621 = vpop.xlane.xlu0 %620
        %v622 = vsel %vm561, %v603, 0.0
        %623 = vadd.xlane.f32.xlu0 %v622
        %v624 = vpop.xlane.xlu0 %623
        %v625 = vsel %vm561, %v605, 0.0
        %626 = vadd.xlane.f32.xlu0 %v625
        %v627 = vpop.xlane.xlu0 %626
        %v628 = vsel %vm561, %v607, 0.0
        %629 = vadd.xlane.f32.xlu0 %v628
        %v630 = vpop.xlane.xlu0 %629
        %v631 = vsel %vm561, %v609, 0.0
        %632 = vadd.xlane.f32.xlu0 %v631
        %v633 = vpop.xlane.xlu0 %632
        %v634 = vrcp.pop %v612
        %v635 = vrcp.pop %v615
        %v636 = vrcp.pop %v618
        %v637 = vrcp.pop %v621
        %v638 = vrcp.pop %v624
        %v639 = vrcp.pop %v627
        %v640 = vrcp.pop %v630
        %v641 = vrcp.pop %v633
        %v642 = vmul.f32 %v595, %v634
        %v643 = vmul.f32 %v597, %v635
        %v644 = vmul.f32 %v599, %v636
        %v645 = vmul.f32 %v601, %v637
        %v646 = vmul.f32 %v603, %v638
        %v647 = vmul.f32 %v605, %v639
        %v648 = vmul.f32 %v607, %v640
        %v649 = vmul.f32 %v609, %v641
        %v650 = vpack.c.bf16 %v642, %v642
        %v651 = vpack.c.bf16 %v643, %v643
        %v652 = vpack.c.bf16 %v644, %v644
        %v653 = vpack.c.bf16 %v645, %v645
        %v654 = vpack.c.bf16 %v646, %v646
        %v655 = vpack.c.bf16 %v647, %v647
        %v656 = vpack.c.bf16 %v648, %v648
        %v657 = vpack.c.bf16 %v649, %v649
        %v660 = vunpack.c.l.b16 %v650
        %v661 = vunpack.c.l.b16 %v651
        %v662 = vpack.c.b16 %v661, %v660
        %663 = vrot.lane.b32.xlu0 %v441, 64
        %v664 = vpop.permute.xlu0 %663
        %v667 = vsel %vm561, %v662, 0
        %669 = vmatpush.bf16.msra.mxu0 0
        %670 = vmatpush.bf16.msra.mxu0 0
        %671 = vmatpush.bf16.msra.mxu0 0
        %672 = vmatpush.bf16.msra.mxu0 0
        %673 = vmatpush.bf16.msra.mxu0 0
        %674 = vmatpush.bf16.msra.mxu0 0
        %675 = vmatpush.bf16.msra.mxu0 0
        %676 = vmatpush.bf16.msra.mxu0 %v664
        %677 = vmatmul.bf16.gmra.mxu0 %v667
        %v678 = vpop.f32.mrf.mxu0
        %v679 = vadd.f32 0.0, %v678
        %v680 = vpop.f32.mrf.mxu0
        %v681 = vadd.f32 0.0, %v680
        %682 = vdwg.mxu0
        %v685 = vunpack.c.l.b16 %v652
        %v686 = vunpack.c.l.b16 %v653
        %v687 = vpack.c.b16 %v686, %v685
        %688 = vrot.lane.b32.xlu0 %v474, 64
        %v689 = vpop.permute.xlu0 %688
        %v692 = vsel %vm561, %v687, 0
        %694 = vmatpush.bf16.msra.mxu0 0
        %695 = vmatpush.bf16.msra.mxu0 0
        %696 = vmatpush.bf16.msra.mxu0 0
        %697 = vmatpush.bf16.msra.mxu0 0
        %698 = vmatpush.bf16.msra.mxu0 0
        %699 = vmatpush.bf16.msra.mxu0 0
        %700 = vmatpush.bf16.msra.mxu0 0
        %701 = vmatpush.bf16.msra.mxu0 %v689
        %702 = vmatmul.bf16.gmra.mxu0 %v692
        %v703 = vpop.f32.mrf.mxu0
        %v704 = vadd.f32 0.0, %v703
        %v705 = vpop.f32.mrf.mxu0
        %v706 = vadd.f32 0.0, %v705
        %707 = vdwg.mxu0
        %v710 = vunpack.c.l.b16 %v654
        %v711 = vunpack.c.l.b16 %v655
        %v712 = vpack.c.b16 %v711, %v710
        %713 = vrot.lane.b32.xlu0 %v506, 64
        %v714 = vpop.permute.xlu0 %713
        %v717 = vsel %vm561, %v712, 0
        %719 = vmatpush.bf16.msra.mxu0 0
        %720 = vmatpush.bf16.msra.mxu0 0
        %721 = vmatpush.bf16.msra.mxu0 0
        %722 = vmatpush.bf16.msra.mxu0 0
        %723 = vmatpush.bf16.msra.mxu0 0
        %724 = vmatpush.bf16.msra.mxu0 0
        %725 = vmatpush.bf16.msra.mxu0 0
        %726 = vmatpush.bf16.msra.mxu0 %v714
        %727 = vmatmul.bf16.gmra.mxu0 %v717
        %v728 = vpop.f32.mrf.mxu0
        %v729 = vadd.f32 0.0, %v728
        %v730 = vpop.f32.mrf.mxu0
        %v731 = vadd.f32 0.0, %v730
        %732 = vdwg.mxu0
        %v735 = vunpack.c.l.b16 %v656
        %v736 = vunpack.c.l.b16 %v657
        %v737 = vpack.c.b16 %v736, %v735
        %738 = vrot.lane.b32.xlu0 %v538, 64
        %v739 = vpop.permute.xlu0 %738
        %v742 = vsel %vm561, %v737, 0
        %744 = vmatpush.bf16.msra.mxu0 0
        %745 = vmatpush.bf16.msra.mxu0 0
        %746 = vmatpush.bf16.msra.mxu0 0
        %747 = vmatpush.bf16.msra.mxu0 0
        %748 = vmatpush.bf16.msra.mxu0 0
        %749 = vmatpush.bf16.msra.mxu0 0
        %750 = vmatpush.bf16.msra.mxu0 0
        %751 = vmatpush.bf16.msra.mxu0 %v739
        %752 = vmatmul.bf16.gmra.mxu0 %v742
        %v753 = vpop.f32.mrf.mxu0
        %v754 = vadd.f32 0.0, %v753
        %v755 = vpop.f32.mrf.mxu0
        %v756 = vadd.f32 0.0, %v755
        %757 = vdwg.mxu0
        %s758 = scalar_lea.vmem [#allocation7], 64
        %v759 = vld [vmem:[%s758] sm:$0xff]
        %v760 = vld [vmem:[%s758 + $0x8] sm:$0xff]
        %v761 = vld [vmem:[%s758 + $0x10] sm:$0xff]
        %v762 = vld [vmem:[%s758 + $0x18] sm:$0xff]
        %v763 = vld [vmem:[%s758 + $0x20] sm:$0xff]
        %v764 = vld [vmem:[%s758 + $0x28] sm:$0xff]
        %v765 = vld [vmem:[%s758 + $0x30] sm:$0xff]
        %v766 = vld [vmem:[%s758 + $0x38] sm:$0xff]
        %767 = vrot.lane.b32.xlu0 %v436, 120
        %v768 = vpop.permute.xlu0 %767
        %769 = vrot.lane.b32.xlu0 %v441, 88
        %v770 = vpop.permute.xlu0 %769
        %v772 = vsel %vm444, %v768, 0
        %v775 = vsel %vm444, %v770, 0
        %777 = vmatpush.bf16.xpose.msra.mxu0 0
        %778 = vmatpush.bf16.xpose.msra.mxu0 0
        %779 = vmatpush.bf16.xpose.msra.mxu0 0
        %780 = vmatpush.bf16.xpose.msra.mxu0 0
        %781 = vmatpush.bf16.xpose.msra.mxu0 0
        %782 = vmatpush.bf16.xpose.msra.mxu0 0
        %783 = vmatpush.bf16.xpose.msra.mxu0 0
        %784 = vmatpush.bf16.xpose.msra.mxu0 %v775
        %785 = vmatmul.bf16.gmra.mxu0 %v772
        %v786 = vpop.f32.mrf.mxu0
        %v787 = vadd.f32 %v759, %v786
        %v788 = vpop.f32.mrf.mxu0
        %v789 = vadd.f32 %v760, %v788
        %790 = vdwg.mxu0
        %791 = vrot.lane.b32.xlu0 %v469, 120
        %v792 = vpop.permute.xlu0 %791
        %793 = vrot.lane.b32.xlu0 %v474, 88
        %v794 = vpop.permute.xlu0 %793
        %v796 = vsel %vm444, %v792, 0
        %v799 = vsel %vm444, %v794, 0
        %801 = vmatpush.bf16.xpose.msra.mxu0 0
        %802 = vmatpush.bf16.xpose.msra.mxu0 0
        %803 = vmatpush.bf16.xpose.msra.mxu0 0
        %804 = vmatpush.bf16.xpose.msra.mxu0 0
        %805 = vmatpush.bf16.xpose.msra.mxu0 0
        %806 = vmatpush.bf16.xpose.msra.mxu0 0
        %807 = vmatpush.bf16.xpose.msra.mxu0 0
        %808 = vmatpush.bf16.xpose.msra.mxu0 %v799
        %809 = vmatmul.bf16.gmra.mxu0 %v796
        %v810 = vpop.f32.mrf.mxu0
        %v811 = vadd.f32 %v761, %v810
        %v812 = vpop.f32.mrf.mxu0
        %v813 = vadd.f32 %v762, %v812
        %814 = vdwg.mxu0
        %815 = vrot.lane.b32.xlu0 %v501, 120
        %v816 = vpop.permute.xlu0 %815
        %817 = vrot.lane.b32.xlu0 %v506, 88
        %v818 = vpop.permute.xlu0 %817
        %v820 = vsel %vm444, %v816, 0
        %v823 = vsel %vm444, %v818, 0
        %825 = vmatpush.bf16.xpose.msra.mxu0 0
        %826 = vmatpush.bf16.xpose.msra.mxu0 0
        %827 = vmatpush.bf16.xpose.msra.mxu0 0
        %828 = vmatpush.bf16.xpose.msra.mxu0 0
        %829 = vmatpush.bf16.xpose.msra.mxu0 0
        %830 = vmatpush.bf16.xpose.msra.mxu0 0
        %831 = vmatpush.bf16.xpose.msra.mxu0 0
        %832 = vmatpush.bf16.xpose.msra.mxu0 %v823
        %833 = vmatmul.bf16.gmra.mxu0 %v820
        %v834 = vpop.f32.mrf.mxu0
        %v835 = vadd.f32 %v763, %v834
        %v836 = vpop.f32.mrf.mxu0
        %v837 = vadd.f32 %v764, %v836
        %838 = vdwg.mxu0
        %839 = vrot.lane.b32.xlu0 %v533, 120
        %v840 = vpop.permute.xlu0 %839
        %841 = vrot.lane.b32.xlu0 %v538, 88
        %v842 = vpop.permute.xlu0 %841
        %v844 = vsel %vm444, %v840, 0
        %v847 = vsel %vm444, %v842, 0
        %849 = vmatpush.bf16.xpose.msra.mxu0 0
        %850 = vmatpush.bf16.xpose.msra.mxu0 0
        %851 = vmatpush.bf16.xpose.msra.mxu0 0
        %852 = vmatpush.bf16.xpose.msra.mxu0 0
        %853 = vmatpush.bf16.xpose.msra.mxu0 0
        %854 = vmatpush.bf16.xpose.msra.mxu0 0
        %855 = vmatpush.bf16.xpose.msra.mxu0 0
        %856 = vmatpush.bf16.xpose.msra.mxu0 %v847
        %857 = vmatmul.bf16.gmra.mxu0 %v844
        %v858 = vpop.f32.mrf.mxu0
        %v859 = vadd.f32 %v765, %v858
        %v860 = vpop.f32.mrf.mxu0
        %v861 = vadd.f32 %v766, %v860
        %862 = vdwg.mxu0
        %v863 = vsel %vm561, %v787, -inf
        %864 = vmax.xlane.f32.xlu0 %v863
        %v865 = vpop.xlane.xlu0 %864
        %v866 = vsel %vm561, %v789, -inf
        %867 = vmax.xlane.f32.xlu0 %v866
        %v868 = vpop.xlane.xlu0 %867
        %v869 = vsel %vm561, %v811, -inf
        %870 = vmax.xlane.f32.xlu0 %v869
        %v871 = vpop.xlane.xlu0 %870
        %v872 = vsel %vm561, %v813, -inf
        %873 = vmax.xlane.f32.xlu0 %v872
        %v874 = vpop.xlane.xlu0 %873
        %v875 = vsel %vm561, %v835, -inf
        %876 = vmax.xlane.f32.xlu0 %v875
        %v877 = vpop.xlane.xlu0 %876
        %v878 = vsel %vm561, %v837, -inf
        %879 = vmax.xlane.f32.xlu0 %v878
        %v880 = vpop.xlane.xlu0 %879
        %v881 = vsel %vm561, %v859, -inf
        %882 = vmax.xlane.f32.xlu0 %v881
        %v883 = vpop.xlane.xlu0 %882
        %v884 = vsel %vm561, %v861, -inf
        %885 = vmax.xlane.f32.xlu0 %v884
        %v886 = vpop.xlane.xlu0 %885
        %v887 = vsub.f32 %v787, %v865
        %v888 = vsub.f32 %v789, %v868
        %v889 = vsub.f32 %v811, %v871
        %v890 = vsub.f32 %v813, %v874
        %v891 = vsub.f32 %v835, %v877
        %v892 = vsub.f32 %v837, %v880
        %v893 = vsub.f32 %v859, %v883
        %v894 = vsub.f32 %v861, %v886
        %v895 = vmul.f32 %v887, 1.442695
        %v896 = vpow.pop %v895
        %v897 = vmul.f32 %v888, 1.442695
        %v898 = vpow.pop %v897
        %v899 = vmul.f32 %v889, 1.442695
        %v900 = vpow.pop %v899
        %v901 = vmul.f32 %v890, 1.442695
        %v902 = vpow.pop %v901
        %v903 = vmul.f32 %v891, 1.442695
        %v904 = vpow.pop %v903
        %v905 = vmul.f32 %v892, 1.442695
        %v906 = vpow.pop %v905
        %v907 = vmul.f32 %v893, 1.442695
        %v908 = vpow.pop %v907
        %v909 = vmul.f32 %v894, 1.442695
        %v910 = vpow.pop %v909
        %v911 = vsel %vm561, %v896, 0.0
        %912 = vadd.xlane.f32.xlu0 %v911
        %v913 = vpop.xlane.xlu0 %912
        %v914 = vsel %vm561, %v898, 0.0
        %915 = vadd.xlane.f32.xlu0 %v914
        %v916 = vpop.xlane.xlu0 %915
        %v917 = vsel %vm561, %v900, 0.0
        %918 = vadd.xlane.f32.xlu0 %v917
        %v919 = vpop.xlane.xlu0 %918
        %v920 = vsel %vm561, %v902, 0.0
        %921 = vadd.xlane.f32.xlu0 %v920
        %v922 = vpop.xlane.xlu0 %921
        %v923 = vsel %vm561, %v904, 0.0
        %924 = vadd.xlane.f32.xlu0 %v923
        %v925 = vpop.xlane.xlu0 %924
        %v926 = vsel %vm561, %v906, 0.0
        %927 = vadd.xlane.f32.xlu0 %v926
        %v928 = vpop.xlane.xlu0 %927
        %v929 = vsel %vm561, %v908, 0.0
        %930 = vadd.xlane.f32.xlu0 %v929
        %v931 = vpop.xlane.xlu0 %930
        %v932 = vsel %vm561, %v910, 0.0
        %933 = vadd.xlane.f32.xlu0 %v932
        %v934 = vpop.xlane.xlu0 %933
        %v935 = vrcp.pop %v913
        %v936 = vrcp.pop %v916
        %v937 = vrcp.pop %v919
        %v938 = vrcp.pop %v922
        %v939 = vrcp.pop %v925
        %v940 = vrcp.pop %v928
        %v941 = vrcp.pop %v931
        %v942 = vrcp.pop %v934
        %v943 = vmul.f32 %v896, %v935
        %v944 = vmul.f32 %v898, %v936
        %v945 = vmul.f32 %v900, %v937
        %v946 = vmul.f32 %v902, %v938
        %v947 = vmul.f32 %v904, %v939
        %v948 = vmul.f32 %v906, %v940
        %v949 = vmul.f32 %v908, %v941
        %v950 = vmul.f32 %v910, %v942
        %v951 = vpack.c.bf16 %v943, %v943
        %v952 = vpack.c.bf16 %v944, %v944
        %v953 = vpack.c.bf16 %v945, %v945
        %v954 = vpack.c.bf16 %v946, %v946
        %v955 = vpack.c.bf16 %v947, %v947
        %v956 = vpack.c.bf16 %v948, %v948
        %v957 = vpack.c.bf16 %v949, %v949
        %v958 = vpack.c.bf16 %v950, %v950
        %v961 = vunpack.c.l.b16 %v951
        %v962 = vunpack.c.l.b16 %v952
        %v963 = vpack.c.b16 %v962, %v961
        %964 = vrot.lane.b32.xlu0 %v441, 56
        %v965 = vpop.permute.xlu0 %964
        %v968 = vsel %vm561, %v963, 0
        %970 = vmatpush.bf16.msra.mxu0 0
        %971 = vmatpush.bf16.msra.mxu0 0
        %972 = vmatpush.bf16.msra.mxu0 0
        %973 = vmatpush.bf16.msra.mxu0 0
        %974 = vmatpush.bf16.msra.mxu0 0
        %975 = vmatpush.bf16.msra.mxu0 0
        %976 = vmatpush.bf16.msra.mxu0 0
        %977 = vmatpush.bf16.msra.mxu0 %v965
        %978 = vmatmul.bf16.gmra.mxu0 %v968
        %v979 = vpop.f32.mrf.mxu0
        %v980 = vadd.f32 0.0, %v979
        %v981 = vpop.f32.mrf.mxu0
        %v982 = vadd.f32 0.0, %v981
        %983 = vdwg.mxu0
        %v986 = vunpack.c.l.b16 %v953
        %v987 = vunpack.c.l.b16 %v954
        %v988 = vpack.c.b16 %v987, %v986
        %989 = vrot.lane.b32.xlu0 %v474, 56
        %v990 = vpop.permute.xlu0 %989
        %v993 = vsel %vm561, %v988, 0
        %995 = vmatpush.bf16.msra.mxu0 0
        %996 = vmatpush.bf16.msra.mxu0 0
        %997 = vmatpush.bf16.msra.mxu0 0
        %998 = vmatpush.bf16.msra.mxu0 0
        %999 = vmatpush.bf16.msra.mxu0 0
        %1000 = vmatpush.bf16.msra.mxu0 0
        %1001 = vmatpush.bf16.msra.mxu0 0
        %1002 = vmatpush.bf16.msra.mxu0 %v990
        %1003 = vmatmul.bf16.gmra.mxu0 %v993
        %v1004 = vpop.f32.mrf.mxu0
        %v1005 = vadd.f32 0.0, %v1004
        %v1006 = vpop.f32.mrf.mxu0
        %v1007 = vadd.f32 0.0, %v1006
        %1008 = vdwg.mxu0
        %v1011 = vunpack.c.l.b16 %v955
        %v1012 = vunpack.c.l.b16 %v956
        %v1013 = vpack.c.b16 %v1012, %v1011
        %1014 = vrot.lane.b32.xlu0 %v506, 56
        %v1015 = vpop.permute.xlu0 %1014
        %v1018 = vsel %vm561, %v1013, 0
        %1020 = vmatpush.bf16.msra.mxu0 0
        %1021 = vmatpush.bf16.msra.mxu0 0
        %1022 = vmatpush.bf16.msra.mxu0 0
        %1023 = vmatpush.bf16.msra.mxu0 0
        %1024 = vmatpush.bf16.msra.mxu0 0
        %1025 = vmatpush.bf16.msra.mxu0 0
        %1026 = vmatpush.bf16.msra.mxu0 0
        %1027 = vmatpush.bf16.msra.mxu0 %v1015
        %1028 = vmatmul.bf16.gmra.mxu0 %v1018
        %v1029 = vpop.f32.mrf.mxu0
        %v1030 = vadd.f32 0.0, %v1029
        %v1031 = vpop.f32.mrf.mxu0
        %v1032 = vadd.f32 0.0, %v1031
        %1033 = vdwg.mxu0
        %v1036 = vunpack.c.l.b16 %v957
        %v1037 = vunpack.c.l.b16 %v958
        %v1038 = vpack.c.b16 %v1037, %v1036
        %1039 = vrot.lane.b32.xlu0 %v538, 56
        %v1040 = vpop.permute.xlu0 %1039
        %v1043 = vsel %vm561, %v1038, 0
        %1045 = vmatpush.bf16.msra.mxu0 0
        %1046 = vmatpush.bf16.msra.mxu0 0
        %1047 = vmatpush.bf16.msra.mxu0 0
        %1048 = vmatpush.bf16.msra.mxu0 0
        %1049 = vmatpush.bf16.msra.mxu0 0
        %1050 = vmatpush.bf16.msra.mxu0 0
        %1051 = vmatpush.bf16.msra.mxu0 0
        %1052 = vmatpush.bf16.msra.mxu0 %v1040
        %1053 = vmatmul.bf16.gmra.mxu0 %v1043
        %v1054 = vpop.f32.mrf.mxu0
        %v1055 = vadd.f32 0.0, %v1054
        %v1056 = vpop.f32.mrf.mxu0
        %v1057 = vadd.f32 0.0, %v1056
        %1058 = vdwg.mxu0
        %s1059 = scalar_lea.vmem [#allocation7], 128
        %v1060 = vld [vmem:[%s1059] sm:$0xff]
        %v1061 = vld [vmem:[%s1059 + $0x8] sm:$0xff]
        %v1062 = vld [vmem:[%s1059 + $0x10] sm:$0xff]
        %v1063 = vld [vmem:[%s1059 + $0x18] sm:$0xff]
        %v1064 = vld [vmem:[%s1059 + $0x20] sm:$0xff]
        %v1065 = vld [vmem:[%s1059 + $0x28] sm:$0xff]
        %v1066 = vld [vmem:[%s1059 + $0x30] sm:$0xff]
        %v1067 = vld [vmem:[%s1059 + $0x38] sm:$0xff]
        %1068 = vrot.lane.b32.xlu0 %v436, 112
        %v1069 = vpop.permute.xlu0 %1068
        %1070 = vrot.lane.b32.xlu0 %v441, 80
        %v1071 = vpop.permute.xlu0 %1070
        %v1073 = vsel %vm444, %v1069, 0
        %v1076 = vsel %vm444, %v1071, 0
        %1078 = vmatpush.bf16.xpose.msra.mxu0 0
        %1079 = vmatpush.bf16.xpose.msra.mxu0 0
        %1080 = vmatpush.bf16.xpose.msra.mxu0 0
        %1081 = vmatpush.bf16.xpose.msra.mxu0 0
        %1082 = vmatpush.bf16.xpose.msra.mxu0 0
        %1083 = vmatpush.bf16.xpose.msra.mxu0 0
        %1084 = vmatpush.bf16.xpose.msra.mxu0 0
        %1085 = vmatpush.bf16.xpose.msra.mxu0 %v1076
        %1086 = vmatmul.bf16.gmra.mxu0 %v1073
        %v1087 = vpop.f32.mrf.mxu0
        %v1088 = vadd.f32 %v1060, %v1087
        %v1089 = vpop.f32.mrf.mxu0
        %v1090 = vadd.f32 %v1061, %v1089
        %1091 = vdwg.mxu0
        %1092 = vrot.lane.b32.xlu0 %v469, 112
        %v1093 = vpop.permute.xlu0 %1092
        %1094 = vrot.lane.b32.xlu0 %v474, 80
        %v1095 = vpop.permute.xlu0 %1094
        %v1097 = vsel %vm444, %v1093, 0
        %v1100 = vsel %vm444, %v1095, 0
        %1102 = vmatpush.bf16.xpose.msra.mxu0 0
        %1103 = vmatpush.bf16.xpose.msra.mxu0 0
        %1104 = vmatpush.bf16.xpose.msra.mxu0 0
        %1105 = vmatpush.bf16.xpose.msra.mxu0 0
        %1106 = vmatpush.bf16.xpose.msra.mxu0 0
        %1107 = vmatpush.bf16.xpose.msra.mxu0 0
        %1108 = vmatpush.bf16.xpose.msra.mxu0 0
        %1109 = vmatpush.bf16.xpose.msra.mxu0 %v1100
        %1110 = vmatmul.bf16.gmra.mxu0 %v1097
        %v1111 = vpop.f32.mrf.mxu0
        %v1112 = vadd.f32 %v1062, %v1111
        %v1113 = vpop.f32.mrf.mxu0
        %v1114 = vadd.f32 %v1063, %v1113
        %1115 = vdwg.mxu0
        %1116 = vrot.lane.b32.xlu0 %v501, 112
        %v1117 = vpop.permute.xlu0 %1116
        %1118 = vrot.lane.b32.xlu0 %v506, 80
        %v1119 = vpop.permute.xlu0 %1118
        %v1121 = vsel %vm444, %v1117, 0
        %v1124 = vsel %vm444, %v1119, 0
        %1126 = vmatpush.bf16.xpose.msra.mxu0 0
        %1127 = vmatpush.bf16.xpose.msra.mxu0 0
        %1128 = vmatpush.bf16.xpose.msra.mxu0 0
        %1129 = vmatpush.bf16.xpose.msra.mxu0 0
        %1130 = vmatpush.bf16.xpose.msra.mxu0 0
        %1131 = vmatpush.bf16.xpose.msra.mxu0 0
        %1132 = vmatpush.bf16.xpose.msra.mxu0 0
        %1133 = vmatpush.bf16.xpose.msra.mxu0 %v1124
        %1134 = vmatmul.bf16.gmra.mxu0 %v1121
        %v1135 = vpop.f32.mrf.mxu0
        %v1136 = vadd.f32 %v1064, %v1135
        %v1137 = vpop.f32.mrf.mxu0
        %v1138 = vadd.f32 %v1065, %v1137
        %1139 = vdwg.mxu0
        %1140 = vrot.lane.b32.xlu0 %v533, 112
        %v1141 = vpop.permute.xlu0 %1140
        %1142 = vrot.lane.b32.xlu0 %v538, 80
        %v1143 = vpop.permute.xlu0 %1142
        %v1145 = vsel %vm444, %v1141, 0
        %v1148 = vsel %vm444, %v1143, 0
        %1150 = vmatpush.bf16.xpose.msra.mxu0 0
        %1151 = vmatpush.bf16.xpose.msra.mxu0 0
        %1152 = vmatpush.bf16.xpose.msra.mxu0 0
        %1153 = vmatpush.bf16.xpose.msra.mxu0 0
        %1154 = vmatpush.bf16.xpose.msra.mxu0 0
        %1155 = vmatpush.bf16.xpose.msra.mxu0 0
        %1156 = vmatpush.bf16.xpose.msra.mxu0 0
        %1157 = vmatpush.bf16.xpose.msra.mxu0 %v1148
        %1158 = vmatmul.bf16.gmra.mxu0 %v1145
        %v1159 = vpop.f32.mrf.mxu0
        %v1160 = vadd.f32 %v1066, %v1159
        %v1161 = vpop.f32.mrf.mxu0
        %v1162 = vadd.f32 %v1067, %v1161
        %1163 = vdwg.mxu0
        %v1164 = vsel %vm561, %v1088, -inf
        %1165 = vmax.xlane.f32.xlu0 %v1164
        %v1166 = vpop.xlane.xlu0 %1165
        %v1167 = vsel %vm561, %v1090, -inf
        %1168 = vmax.xlane.f32.xlu0 %v1167
        %v1169 = vpop.xlane.xlu0 %1168
        %v1170 = vsel %vm561, %v1112, -inf
        %1171 = vmax.xlane.f32.xlu0 %v1170
        %v1172 = vpop.xlane.xlu0 %1171
        %v1173 = vsel %vm561, %v1114, -inf
        %1174 = vmax.xlane.f32.xlu0 %v1173
        %v1175 = vpop.xlane.xlu0 %1174
        %v1176 = vsel %vm561, %v1136, -inf
        %1177 = vmax.xlane.f32.xlu0 %v1176
        %v1178 = vpop.xlane.xlu0 %1177
        %v1179 = vsel %vm561, %v1138, -inf
        %1180 = vmax.xlane.f32.xlu0 %v1179
        %v1181 = vpop.xlane.xlu0 %1180
        %v1182 = vsel %vm561, %v1160, -inf
        %1183 = vmax.xlane.f32.xlu0 %v1182
        %v1184 = vpop.xlane.xlu0 %1183
        %v1185 = vsel %vm561, %v1162, -inf
        %1186 = vmax.xlane.f32.xlu0 %v1185
        %v1187 = vpop.xlane.xlu0 %1186
        %v1188 = vsub.f32 %v1088, %v1166
        %v1189 = vsub.f32 %v1090, %v1169
        %v1190 = vsub.f32 %v1112, %v1172
        %v1191 = vsub.f32 %v1114, %v1175
        %v1192 = vsub.f32 %v1136, %v1178
        %v1193 = vsub.f32 %v1138, %v1181
        %v1194 = vsub.f32 %v1160, %v1184
        %v1195 = vsub.f32 %v1162, %v1187
        %v1196 = vmul.f32 %v1188, 1.442695
        %v1197 = vpow.pop %v1196
        %v1198 = vmul.f32 %v1189, 1.442695
        %v1199 = vpow.pop %v1198
        %v1200 = vmul.f32 %v1190, 1.442695
        %v1201 = vpow.pop %v1200
        %v1202 = vmul.f32 %v1191, 1.442695
        %v1203 = vpow.pop %v1202
        %v1204 = vmul.f32 %v1192, 1.442695
        %v1205 = vpow.pop %v1204
        %v1206 = vmul.f32 %v1193, 1.442695
        %v1207 = vpow.pop %v1206
        %v1208 = vmul.f32 %v1194, 1.442695
        %v1209 = vpow.pop %v1208
        %v1210 = vmul.f32 %v1195, 1.442695
        %v1211 = vpow.pop %v1210
        %v1212 = vsel %vm561, %v1197, 0.0
        %1213 = vadd.xlane.f32.xlu0 %v1212
        %v1214 = vpop.xlane.xlu0 %1213
        %v1215 = vsel %vm561, %v1199, 0.0
        %1216 = vadd.xlane.f32.xlu0 %v1215
        %v1217 = vpop.xlane.xlu0 %1216
        %v1218 = vsel %vm561, %v1201, 0.0
        %1219 = vadd.xlane.f32.xlu0 %v1218
        %v1220 = vpop.xlane.xlu0 %1219
        %v1221 = vsel %vm561, %v1203, 0.0
        %1222 = vadd.xlane.f32.xlu0 %v1221
        %v1223 = vpop.xlane.xlu0 %1222
        %v1224 = vsel %vm561, %v1205, 0.0
        %1225 = vadd.xlane.f32.xlu0 %v1224
        %v1226 = vpop.xlane.xlu0 %1225
        %v1227 = vsel %vm561, %v1207, 0.0
        %1228 = vadd.xlane.f32.xlu0 %v1227
        %v1229 = vpop.xlane.xlu0 %1228
        %v1230 = vsel %vm561, %v1209, 0.0
        %1231 = vadd.xlane.f32.xlu0 %v1230
        %v1232 = vpop.xlane.xlu0 %1231
        %v1233 = vsel %vm561, %v1211, 0.0
        %1234 = vadd.xlane.f32.xlu0 %v1233
        %v1235 = vpop.xlane.xlu0 %1234
        %v1236 = vrcp.pop %v1214
        %v1237 = vrcp.pop %v1217
        %v1238 = vrcp.pop %v1220
        %v1239 = vrcp.pop %v1223
        %v1240 = vrcp.pop %v1226
        %v1241 = vrcp.pop %v1229
        %v1242 = vrcp.pop %v1232
        %v1243 = vrcp.pop %v1235
        %v1244 = vmul.f32 %v1197, %v1236
        %v1245 = vmul.f32 %v1199, %v1237
        %v1246 = vmul.f32 %v1201, %v1238
        %v1247 = vmul.f32 %v1203, %v1239
        %v1248 = vmul.f32 %v1205, %v1240
        %v1249 = vmul.f32 %v1207, %v1241
        %v1250 = vmul.f32 %v1209, %v1242
        %v1251 = vmul.f32 %v1211, %v1243
        %v1252 = vpack.c.bf16 %v1244, %v1244
        %v1253 = vpack.c.bf16 %v1245, %v1245
        %v1254 = vpack.c.bf16 %v1246, %v1246
        %v1255 = vpack.c.bf16 %v1247, %v1247
        %v1256 = vpack.c.bf16 %v1248, %v1248
        %v1257 = vpack.c.bf16 %v1249, %v1249
        %v1258 = vpack.c.bf16 %v1250, %v1250
        %v1259 = vpack.c.bf16 %v1251, %v1251
        %v1262 = vunpack.c.l.b16 %v1252
        %v1263 = vunpack.c.l.b16 %v1253
        %v1264 = vpack.c.b16 %v1263, %v1262
        %1265 = vrot.lane.b32.xlu0 %v441, 48
        %v1266 = vpop.permute.xlu0 %1265
        %v1269 = vsel %vm561, %v1264, 0
        %1271 = vmatpush.bf16.msra.mxu0 0
        %1272 = vmatpush.bf16.msra.mxu0 0
        %1273 = vmatpush.bf16.msra.mxu0 0
        %1274 = vmatpush.bf16.msra.mxu0 0
        %1275 = vmatpush.bf16.msra.mxu0 0
        %1276 = vmatpush.bf16.msra.mxu0 0
        %1277 = vmatpush.bf16.msra.mxu0 0
        %1278 = vmatpush.bf16.msra.mxu0 %v1266
        %1279 = vmatmul.bf16.gmra.mxu0 %v1269
        %v1280 = vpop.f32.mrf.mxu0
        %v1281 = vadd.f32 0.0, %v1280
        %v1282 = vpop.f32.mrf.mxu0
        %v1283 = vadd.f32 0.0, %v1282
        %1284 = vdwg.mxu0
        %v1287 = vunpack.c.l.b16 %v1254
        %v1288 = vunpack.c.l.b16 %v1255
        %v1289 = vpack.c.b16 %v1288, %v1287
        %1290 = vrot.lane.b32.xlu0 %v474, 48
        %v1291 = vpop.permute.xlu0 %1290
        %v1294 = vsel %vm561, %v1289, 0
        %1296 = vmatpush.bf16.msra.mxu0 0
        %1297 = vmatpush.bf16.msra.mxu0 0
        %1298 = vmatpush.bf16.msra.mxu0 0
        %1299 = vmatpush.bf16.msra.mxu0 0
        %1300 = vmatpush.bf16.msra.mxu0 0
        %1301 = vmatpush.bf16.msra.mxu0 0
        %1302 = vmatpush.bf16.msra.mxu0 0
        %1303 = vmatpush.bf16.msra.mxu0 %v1291
        %1304 = vmatmul.bf16.gmra.mxu0 %v1294
        %v1305 = vpop.f32.mrf.mxu0
        %v1306 = vadd.f32 0.0, %v1305
        %v1307 = vpop.f32.mrf.mxu0
        %v1308 = vadd.f32 0.0, %v1307
        %1309 = vdwg.mxu0
        %v1312 = vunpack.c.l.b16 %v1256
        %v1313 = vunpack.c.l.b16 %v1257
        %v1314 = vpack.c.b16 %v1313, %v1312
        %1315 = vrot.lane.b32.xlu0 %v506, 48
        %v1316 = vpop.permute.xlu0 %1315
        %v1319 = vsel %vm561, %v1314, 0
        %1321 = vmatpush.bf16.msra.mxu0 0
        %1322 = vmatpush.bf16.msra.mxu0 0
        %1323 = vmatpush.bf16.msra.mxu0 0
        %1324 = vmatpush.bf16.msra.mxu0 0
        %1325 = vmatpush.bf16.msra.mxu0 0
        %1326 = vmatpush.bf16.msra.mxu0 0
        %1327 = vmatpush.bf16.msra.mxu0 0
        %1328 = vmatpush.bf16.msra.mxu0 %v1316
        %1329 = vmatmul.bf16.gmra.mxu0 %v1319
        %v1330 = vpop.f32.mrf.mxu0
        %v1331 = vadd.f32 0.0, %v1330
        %v1332 = vpop.f32.mrf.mxu0
        %v1333 = vadd.f32 0.0, %v1332
        %1334 = vdwg.mxu0
        %v1337 = vunpack.c.l.b16 %v1258
        %v1338 = vunpack.c.l.b16 %v1259
        %v1339 = vpack.c.b16 %v1338, %v1337
        %1340 = vrot.lane.b32.xlu0 %v538, 48
        %v1341 = vpop.permute.xlu0 %1340
        %v1344 = vsel %vm561, %v1339, 0
        %1346 = vmatpush.bf16.msra.mxu0 0
        %1347 = vmatpush.bf16.msra.mxu0 0
        %1348 = vmatpush.bf16.msra.mxu0 0
        %1349 = vmatpush.bf16.msra.mxu0 0
        %1350 = vmatpush.bf16.msra.mxu0 0
        %1351 = vmatpush.bf16.msra.mxu0 0
        %1352 = vmatpush.bf16.msra.mxu0 0
        %1353 = vmatpush.bf16.msra.mxu0 %v1341
        %1354 = vmatmul.bf16.gmra.mxu0 %v1344
        %v1355 = vpop.f32.mrf.mxu0
        %v1356 = vadd.f32 0.0, %v1355
        %v1357 = vpop.f32.mrf.mxu0
        %v1358 = vadd.f32 0.0, %v1357
        %1359 = vdwg.mxu0
        %s1360 = scalar_lea.vmem [#allocation7], 192
        %v1361 = vld [vmem:[%s1360] sm:$0xff]
        %v1362 = vld [vmem:[%s1360 + $0x8] sm:$0xff]
        %v1363 = vld [vmem:[%s1360 + $0x10] sm:$0xff]
        %v1364 = vld [vmem:[%s1360 + $0x18] sm:$0xff]
        %v1365 = vld [vmem:[%s1360 + $0x20] sm:$0xff]
        %v1366 = vld [vmem:[%s1360 + $0x28] sm:$0xff]
        %v1367 = vld [vmem:[%s1360 + $0x30] sm:$0xff]
        %v1368 = vld [vmem:[%s1360 + $0x38] sm:$0xff]
        %1369 = vrot.lane.b32.xlu0 %v436, 104
        %v1370 = vpop.permute.xlu0 %1369
        %1371 = vrot.lane.b32.xlu0 %v441, 72
        %v1372 = vpop.permute.xlu0 %1371
        %v1374 = vsel %vm444, %v1370, 0
        %v1377 = vsel %vm444, %v1372, 0
        %1379 = vmatpush.bf16.xpose.msra.mxu0 0
        %1380 = vmatpush.bf16.xpose.msra.mxu0 0
        %1381 = vmatpush.bf16.xpose.msra.mxu0 0
        %1382 = vmatpush.bf16.xpose.msra.mxu0 0
        %1383 = vmatpush.bf16.xpose.msra.mxu0 0
        %1384 = vmatpush.bf16.xpose.msra.mxu0 0
        %1385 = vmatpush.bf16.xpose.msra.mxu0 0
        %1386 = vmatpush.bf16.xpose.msra.mxu0 %v1377
        %1387 = vmatmul.bf16.gmra.mxu0 %v1374
        %v1388 = vpop.f32.mrf.mxu0
        %v1389 = vadd.f32 %v1361, %v1388
        %v1390 = vpop.f32.mrf.mxu0
        %v1391 = vadd.f32 %v1362, %v1390
        %1392 = vdwg.mxu0
        %1393 = vrot.lane.b32.xlu0 %v469, 104
        %v1394 = vpop.permute.xlu0 %1393
        %1395 = vrot.lane.b32.xlu0 %v474, 72
        %v1396 = vpop.permute.xlu0 %1395
        %v1398 = vsel %vm444, %v1394, 0
        %v1401 = vsel %vm444, %v1396, 0
        %1403 = vmatpush.bf16.xpose.msra.mxu0 0
        %1404 = vmatpush.bf16.xpose.msra.mxu0 0
        %1405 = vmatpush.bf16.xpose.msra.mxu0 0
        %1406 = vmatpush.bf16.xpose.msra.mxu0 0
        %1407 = vmatpush.bf16.xpose.msra.mxu0 0
        %1408 = vmatpush.bf16.xpose.msra.mxu0 0
        %1409 = vmatpush.bf16.xpose.msra.mxu0 0
        %1410 = vmatpush.bf16.xpose.msra.mxu0 %v1401
        %1411 = vmatmul.bf16.gmra.mxu0 %v1398
        %v1412 = vpop.f32.mrf.mxu0
        %v1413 = vadd.f32 %v1363, %v1412
        %v1414 = vpop.f32.mrf.mxu0
        %v1415 = vadd.f32 %v1364, %v1414
        %1416 = vdwg.mxu0
        %1417 = vrot.lane.b32.xlu0 %v501, 104
        %v1418 = vpop.permute.xlu0 %1417
        %1419 = vrot.lane.b32.xlu0 %v506, 72
        %v1420 = vpop.permute.xlu0 %1419
        %v1422 = vsel %vm444, %v1418, 0
        %v1425 = vsel %vm444, %v1420, 0
        %1427 = vmatpush.bf16.xpose.msra.mxu0 0
        %1428 = vmatpush.bf16.xpose.msra.mxu0 0
        %1429 = vmatpush.bf16.xpose.msra.mxu0 0
        %1430 = vmatpush.bf16.xpose.msra.mxu0 0
        %1431 = vmatpush.bf16.xpose.msra.mxu0 0
        %1432 = vmatpush.bf16.xpose.msra.mxu0 0
        %1433 = vmatpush.bf16.xpose.msra.mxu0 0
        %1434 = vmatpush.bf16.xpose.msra.mxu0 %v1425
        %1435 = vmatmul.bf16.gmra.mxu0 %v1422
        %v1436 = vpop.f32.mrf.mxu0
        %v1437 = vadd.f32 %v1365, %v1436
        %v1438 = vpop.f32.mrf.mxu0
        %v1439 = vadd.f32 %v1366, %v1438
        %1440 = vdwg.mxu0
        %1441 = vrot.lane.b32.xlu0 %v533, 104
        %v1442 = vpop.permute.xlu0 %1441
        %1443 = vrot.lane.b32.xlu0 %v538, 72
        %v1444 = vpop.permute.xlu0 %1443
        %v1446 = vsel %vm444, %v1442, 0
        %v1449 = vsel %vm444, %v1444, 0
        %1451 = vmatpush.bf16.xpose.msra.mxu0 0
        %1452 = vmatpush.bf16.xpose.msra.mxu0 0
        %1453 = vmatpush.bf16.xpose.msra.mxu0 0
        %1454 = vmatpush.bf16.xpose.msra.mxu0 0
        %1455 = vmatpush.bf16.xpose.msra.mxu0 0
        %1456 = vmatpush.bf16.xpose.msra.mxu0 0
        %1457 = vmatpush.bf16.xpose.msra.mxu0 0
        %1458 = vmatpush.bf16.xpose.msra.mxu0 %v1449
        %1459 = vmatmul.bf16.gmra.mxu0 %v1446
        %v1460 = vpop.f32.mrf.mxu0
        %v1461 = vadd.f32 %v1367, %v1460
        %v1462 = vpop.f32.mrf.mxu0
        %v1463 = vadd.f32 %v1368, %v1462
        %1464 = vdwg.mxu0
        %v1465 = vsel %vm561, %v1389, -inf
        %1466 = vmax.xlane.f32.xlu0 %v1465
        %v1467 = vpop.xlane.xlu0 %1466
        %v1468 = vsel %vm561, %v1391, -inf
        %1469 = vmax.xlane.f32.xlu0 %v1468
        %v1470 = vpop.xlane.xlu0 %1469
        %v1471 = vsel %vm561, %v1413, -inf
        %1472 = vmax.xlane.f32.xlu0 %v1471
        %v1473 = vpop.xlane.xlu0 %1472
        %v1474 = vsel %vm561, %v1415, -inf
        %1475 = vmax.xlane.f32.xlu0 %v1474
        %v1476 = vpop.xlane.xlu0 %1475
        %v1477 = vsel %vm561, %v1437, -inf
        %1478 = vmax.xlane.f32.xlu0 %v1477
        %v1479 = vpop.xlane.xlu0 %1478
        %v1480 = vsel %vm561, %v1439, -inf
        %1481 = vmax.xlane.f32.xlu0 %v1480
        %v1482 = vpop.xlane.xlu0 %1481
        %v1483 = vsel %vm561, %v1461, -inf
        %1484 = vmax.xlane.f32.xlu0 %v1483
        %v1485 = vpop.xlane.xlu0 %1484
        %v1486 = vsel %vm561, %v1463, -inf
        %1487 = vmax.xlane.f32.xlu0 %v1486
        %v1488 = vpop.xlane.xlu0 %1487
        %v1489 = vsub.f32 %v1389, %v1467
        %v1490 = vsub.f32 %v1391, %v1470
        %v1491 = vsub.f32 %v1413, %v1473
        %v1492 = vsub.f32 %v1415, %v1476
        %v1493 = vsub.f32 %v1437, %v1479
        %v1494 = vsub.f32 %v1439, %v1482
        %v1495 = vsub.f32 %v1461, %v1485
        %v1496 = vsub.f32 %v1463, %v1488
        %v1497 = vmul.f32 %v1489, 1.442695
        %v1498 = vpow.pop %v1497
        %v1499 = vmul.f32 %v1490, 1.442695
        %v1500 = vpow.pop %v1499
        %v1501 = vmul.f32 %v1491, 1.442695
        %v1502 = vpow.pop %v1501
        %v1503 = vmul.f32 %v1492, 1.442695
        %v1504 = vpow.pop %v1503
        %v1505 = vmul.f32 %v1493, 1.442695
        %v1506 = vpow.pop %v1505
        %v1507 = vmul.f32 %v1494, 1.442695
        %v1508 = vpow.pop %v1507
        %v1509 = vmul.f32 %v1495, 1.442695
        %v1510 = vpow.pop %v1509
        %v1511 = vmul.f32 %v1496, 1.442695
        %v1512 = vpow.pop %v1511
        %v1513 = vsel %vm561, %v1498, 0.0
        %1514 = vadd.xlane.f32.xlu0 %v1513
        %v1515 = vpop.xlane.xlu0 %1514
        %v1516 = vsel %vm561, %v1500, 0.0
        %1517 = vadd.xlane.f32.xlu0 %v1516
        %v1518 = vpop.xlane.xlu0 %1517
        %v1519 = vsel %vm561, %v1502, 0.0
        %1520 = vadd.xlane.f32.xlu0 %v1519
        %v1521 = vpop.xlane.xlu0 %1520
        %v1522 = vsel %vm561, %v1504, 0.0
        %1523 = vadd.xlane.f32.xlu0 %v1522
        %v1524 = vpop.xlane.xlu0 %1523
        %v1525 = vsel %vm561, %v1506, 0.0
        %1526 = vadd.xlane.f32.xlu0 %v1525
        %v1527 = vpop.xlane.xlu0 %1526
        %v1528 = vsel %vm561, %v1508, 0.0
        %1529 = vadd.xlane.f32.xlu0 %v1528
        %v1530 = vpop.xlane.xlu0 %1529
        %v1531 = vsel %vm561, %v1510, 0.0
        %1532 = vadd.xlane.f32.xlu0 %v1531
        %v1533 = vpop.xlane.xlu0 %1532
        %v1534 = vsel %vm561, %v1512, 0.0
        %1535 = vadd.xlane.f32.xlu0 %v1534
        %v1536 = vpop.xlane.xlu0 %1535
        %v1537 = vrcp.pop %v1515
        %v1538 = vrcp.pop %v1518
        %v1539 = vrcp.pop %v1521
        %v1540 = vrcp.pop %v1524
        %v1541 = vrcp.pop %v1527
        %v1542 = vrcp.pop %v1530
        %v1543 = vrcp.pop %v1533
        %v1544 = vrcp.pop %v1536
        %v1545 = vmul.f32 %v1498, %v1537
        %v1546 = vmul.f32 %v1500, %v1538
        %v1547 = vmul.f32 %v1502, %v1539
        %v1548 = vmul.f32 %v1504, %v1540
        %v1549 = vmul.f32 %v1506, %v1541
        %v1550 = vmul.f32 %v1508, %v1542
        %v1551 = vmul.f32 %v1510, %v1543
        %v1552 = vmul.f32 %v1512, %v1544
        %v1553 = vpack.c.bf16 %v1545, %v1545
        %v1554 = vpack.c.bf16 %v1546, %v1546
        %v1555 = vpack.c.bf16 %v1547, %v1547
        %v1556 = vpack.c.bf16 %v1548, %v1548
        %v1557 = vpack.c.bf16 %v1549, %v1549
        %v1558 = vpack.c.bf16 %v1550, %v1550
        %v1559 = vpack.c.bf16 %v1551, %v1551
        %v1560 = vpack.c.bf16 %v1552, %v1552
        %v1563 = vunpack.c.l.b16 %v1553
        %v1564 = vunpack.c.l.b16 %v1554
        %v1565 = vpack.c.b16 %v1564, %v1563
        %1566 = vrot.lane.b32.xlu0 %v441, 40
        %v1567 = vpop.permute.xlu0 %1566
        %v1570 = vsel %vm561, %v1565, 0
        %1572 = vmatpush.bf16.msra.mxu0 0
        %1573 = vmatpush.bf16.msra.mxu0 0
        %1574 = vmatpush.bf16.msra.mxu0 0
        %1575 = vmatpush.bf16.msra.mxu0 0
        %1576 = vmatpush.bf16.msra.mxu0 0
        %1577 = vmatpush.bf16.msra.mxu0 0
        %1578 = vmatpush.bf16.msra.mxu0 0
        %1579 = vmatpush.bf16.msra.mxu0 %v1567
        %1580 = vmatmul.bf16.gmra.mxu0 %v1570
        %v1581 = vpop.f32.mrf.mxu0
        %v1582 = vadd.f32 0.0, %v1581
        %v1583 = vpop.f32.mrf.mxu0
        %v1584 = vadd.f32 0.0, %v1583
        %1585 = vdwg.mxu0
        %v1588 = vunpack.c.l.b16 %v1555
        %v1589 = vunpack.c.l.b16 %v1556
        %v1590 = vpack.c.b16 %v1589, %v1588
        %1591 = vrot.lane.b32.xlu0 %v474, 40
        %v1592 = vpop.permute.xlu0 %1591
        %v1595 = vsel %vm561, %v1590, 0
        %1597 = vmatpush.bf16.msra.mxu0 0
        %1598 = vmatpush.bf16.msra.mxu0 0
        %1599 = vmatpush.bf16.msra.mxu0 0
        %1600 = vmatpush.bf16.msra.mxu0 0
        %1601 = vmatpush.bf16.msra.mxu0 0
        %1602 = vmatpush.bf16.msra.mxu0 0
        %1603 = vmatpush.bf16.msra.mxu0 0
        %1604 = vmatpush.bf16.msra.mxu0 %v1592
        %1605 = vmatmul.bf16.gmra.mxu0 %v1595
        %v1606 = vpop.f32.mrf.mxu0
        %v1607 = vadd.f32 0.0, %v1606
        %v1608 = vpop.f32.mrf.mxu0
        %v1609 = vadd.f32 0.0, %v1608
        %1610 = vdwg.mxu0
        %v1613 = vunpack.c.l.b16 %v1557
        %v1614 = vunpack.c.l.b16 %v1558
        %v1615 = vpack.c.b16 %v1614, %v1613
        %1616 = vrot.lane.b32.xlu0 %v506, 40
        %v1617 = vpop.permute.xlu0 %1616
        %v1620 = vsel %vm561, %v1615, 0
        %1622 = vmatpush.bf16.msra.mxu0 0
        %1623 = vmatpush.bf16.msra.mxu0 0
        %1624 = vmatpush.bf16.msra.mxu0 0
        %1625 = vmatpush.bf16.msra.mxu0 0
        %1626 = vmatpush.bf16.msra.mxu0 0
        %1627 = vmatpush.bf16.msra.mxu0 0
        %1628 = vmatpush.bf16.msra.mxu0 0
        %1629 = vmatpush.bf16.msra.mxu0 %v1617
        %1630 = vmatmul.bf16.gmra.mxu0 %v1620
        %v1631 = vpop.f32.mrf.mxu0
        %v1632 = vadd.f32 0.0, %v1631
        %v1633 = vpop.f32.mrf.mxu0
        %v1634 = vadd.f32 0.0, %v1633
        %1635 = vdwg.mxu0
        %v1638 = vunpack.c.l.b16 %v1559
        %v1639 = vunpack.c.l.b16 %v1560
        %v1640 = vpack.c.b16 %v1639, %v1638
        %1641 = vrot.lane.b32.xlu0 %v538, 40
        %v1642 = vpop.permute.xlu0 %1641
        %v1645 = vsel %vm561, %v1640, 0
        %1647 = vmatpush.bf16.msra.mxu0 0
        %1648 = vmatpush.bf16.msra.mxu0 0
        %1649 = vmatpush.bf16.msra.mxu0 0
        %1650 = vmatpush.bf16.msra.mxu0 0
        %1651 = vmatpush.bf16.msra.mxu0 0
        %1652 = vmatpush.bf16.msra.mxu0 0
        %1653 = vmatpush.bf16.msra.mxu0 0
        %1654 = vmatpush.bf16.msra.mxu0 %v1642
        %1655 = vmatmul.bf16.gmra.mxu0 %v1645
        %v1656 = vpop.f32.mrf.mxu0
        %v1657 = vadd.f32 0.0, %v1656
        %v1658 = vpop.f32.mrf.mxu0
        %v1659 = vadd.f32 0.0, %v1658
        %1660 = vdwg.mxu0
        %1669 = vrot.lane.b32.xlu0 %v980, 8
        %v1670 = vpop.permute.xlu0 %1669
        %1671 = vrot.lane.b32.xlu0 %v982, 8
        %v1672 = vpop.permute.xlu0 %1671
        %1673 = vrot.lane.b32.xlu0 %v1005, 8
        %v1674 = vpop.permute.xlu0 %1673
        %1675 = vrot.lane.b32.xlu0 %v1007, 8
        %v1676 = vpop.permute.xlu0 %1675
        %1677 = vrot.lane.b32.xlu0 %v1030, 8
        %v1678 = vpop.permute.xlu0 %1677
        %1679 = vrot.lane.b32.xlu0 %v1032, 8
        %v1680 = vpop.permute.xlu0 %1679
        %1681 = vrot.lane.b32.xlu0 %v1055, 8
        %v1682 = vpop.permute.xlu0 %1681
        %1683 = vrot.lane.b32.xlu0 %v1057, 8
        %v1684 = vpop.permute.xlu0 %1683
        %1701 = vrot.lane.b32.xlu0 %v1281, 16
        %v1702 = vpop.permute.xlu0 %1701
        %1703 = vrot.lane.b32.xlu0 %v1283, 16
        %v1704 = vpop.permute.xlu0 %1703
        %1705 = vrot.lane.b32.xlu0 %v1306, 16
        %v1706 = vpop.permute.xlu0 %1705
        %1707 = vrot.lane.b32.xlu0 %v1308, 16
        %v1708 = vpop.permute.xlu0 %1707
        %1709 = vrot.lane.b32.xlu0 %v1331, 16
        %v1710 = vpop.permute.xlu0 %1709
        %1711 = vrot.lane.b32.xlu0 %v1333, 16
        %v1712 = vpop.permute.xlu0 %1711
        %1713 = vrot.lane.b32.xlu0 %v1356, 16
        %v1714 = vpop.permute.xlu0 %1713
        %1715 = vrot.lane.b32.xlu0 %v1358, 16
        %v1716 = vpop.permute.xlu0 %1715
        %1733 = vrot.lane.b32.xlu0 %v1582, 24
        %v1734 = vpop.permute.xlu0 %1733
        %1735 = vrot.lane.b32.xlu0 %v1584, 24
        %v1736 = vpop.permute.xlu0 %1735
        %1737 = vrot.lane.b32.xlu0 %v1607, 24
        %v1738 = vpop.permute.xlu0 %1737
        %1739 = vrot.lane.b32.xlu0 %v1609, 24
        %v1740 = vpop.permute.xlu0 %1739
        %1741 = vrot.lane.b32.xlu0 %v1632, 24
        %v1742 = vpop.permute.xlu0 %1741
        %1743 = vrot.lane.b32.xlu0 %v1634, 24
        %v1744 = vpop.permute.xlu0 %1743
        %1745 = vrot.lane.b32.xlu0 %v1657, 24
        %v1746 = vpop.permute.xlu0 %1745
        %1747 = vrot.lane.b32.xlu0 %v1659, 24
        %v1748 = vpop.permute.xlu0 %1747
        %v1757 = vsel %vm444, %v679, %v1670
        %v1758 = vsel %vm444, %v681, %v1672
        %v1759 = vsel %vm444, %v704, %v1674
        %v1760 = vsel %vm444, %v706, %v1676
        %v1761 = vsel %vm444, %v729, %v1678
        %v1762 = vsel %vm444, %v731, %v1680
        %v1763 = vsel %vm444, %v754, %v1682
        %v1764 = vsel %vm444, %v756, %v1684
        %v1765 = vsel %vm561, %v1757, %v1702
        %v1766 = vsel %vm561, %v1758, %v1704
        %v1767 = vsel %vm561, %v1759, %v1706
        %v1768 = vsel %vm561, %v1760, %v1708
        %v1769 = vsel %vm561, %v1761, %v1710
        %v1770 = vsel %vm561, %v1762, %v1712
        %v1771 = vsel %vm561, %v1763, %v1714
        %v1772 = vsel %vm561, %v1764, %v1716
        %vm1773 = vcmask 195584
        %v1774 = vsel %vm1773, %v1765, %v1734
        %v1775 = vsel %vm1773, %v1766, %v1736
        %v1776 = vsel %vm1773, %v1767, %v1738
        %v1777 = vsel %vm1773, %v1768, %v1740
        %v1778 = vsel %vm1773, %v1769, %v1742
        %v1779 = vsel %vm1773, %v1770, %v1744
        %v1780 = vsel %vm1773, %v1771, %v1746
        %v1781 = vsel %vm1773, %v1772, %v1748
        %v1782 = vpack.c.bf16 %v1775, %v1774
        %v1783 = vpack.c.bf16 %v1777, %v1776
        %v1784 = vpack.c.bf16 %v1779, %v1778
        %v1785 = vpack.c.bf16 %v1781, %v1780
        %v1786 = vld [vmem:[#allocation8] sm:$0xf]
        %v1787 = vld [vmem:[#allocation8 + $0x4] sm:$0xf]
        %v1788 = vld [vmem:[#allocation8 + $0x8] sm:$0xf]
        %v1789 = vld [vmem:[#allocation8 + $0xc] sm:$0xf]
        %v1790 = vld [vmem:[%s5] sm:$0x1]
        %v1792 = vperm.slane %v1790, 0
        %v1798 = vunpack.c.l.b16 %v1786
        %v1799 = vunpack.c.l.b16 %v1787
        %v1800 = vunpack.c.l.b16 %v1788
        %v1801 = vunpack.c.l.b16 %v1789
        %v1802 = vpack.c.b16 %v1799, %v1798
        %v1803 = vpack.c.b16 %v1801, %v1800
        %v1807 = vsel %vm358, %v1782, 0
        %v1810 = vsel %vm358, %v1783, 0
        %v1813 = vsel %vm358, %v1784, 0
        %v1816 = vsel %vm358, %v1785, 0
        %1818 = vmatpush.bf16.msra.mxu0 0
        %1819 = vmatpush.bf16.msra.mxu0 0
        %1820 = vmatpush.bf16.msra.mxu0 0
        %1821 = vmatpush.bf16.msra.mxu0 0
        %1822 = vmatpush.bf16.msra.mxu0 0
        %1823 = vmatpush.bf16.msra.mxu0 0
        %1824 = vmatpush.bf16.msra.mxu0 %v1803
        %1825 = vmatpush.bf16.msra.mxu0 %v1802
        %1826 = vmatmul.bf16.gmra.mxu0 %v1807
        %v1827 = vpop.f32.mrf.mxu0
        %v1828 = vadd.f32 %v1792, %v1827
        %v1829 = vpop.f32.mrf.mxu0
        %v1830 = vadd.f32 %v1792, %v1829
        %1831 = vmatmul.bf16.gmra.mxu0 %v1810
        %v1832 = vpop.f32.mrf.mxu0
        %v1833 = vadd.f32 %v1792, %v1832
        %v1834 = vpop.f32.mrf.mxu0
        %v1835 = vadd.f32 %v1792, %v1834
        %1836 = vmatmul.bf16.gmra.mxu0 %v1813
        %v1837 = vpop.f32.mrf.mxu0
        %v1838 = vadd.f32 %v1792, %v1837
        %v1839 = vpop.f32.mrf.mxu0
        %v1840 = vadd.f32 %v1792, %v1839
        %1841 = vmatmul.bf16.gmra.mxu0 %v1816
        %v1842 = vpop.f32.mrf.mxu0
        %v1843 = vadd.f32 %v1792, %v1842
        %v1844 = vpop.f32.mrf.mxu0
        %v1845 = vadd.f32 %v1792, %v1844
        %1846 = vdwg.mxu0
        %1847 = vst.msk [vmem:[%s322] sm:$0xff] %vm358, %v1828
        %1848 = vst.msk [vmem:[%s322 + $0x8] sm:$0xff] %vm358, %v1830
        %1849 = vst.msk [vmem:[%s322 + $0x10] sm:$0xff] %vm358, %v1833
        %1850 = vst.msk [vmem:[%s322 + $0x18] sm:$0xff] %vm358, %v1835
        %1851 = vst.msk [vmem:[%s322 + $0x20] sm:$0xff] %vm358, %v1838
        %1852 = vst.msk [vmem:[%s322 + $0x28] sm:$0xff] %vm358, %v1840
        %1853 = vst.msk [vmem:[%s322 + $0x30] sm:$0xff] %vm358, %v1843
        %1854 = vst.msk [vmem:[%s322 + $0x38] sm:$0xff] %vm358, %v1845
        %s1855 = sand.u32 %s164, 1
        %s1856 = scalar_lea.sflag [#allocation4], %s1855
        %s1857 = sand.u32 %s164, 1
        %s1858 = smul.addr %s1857, 64
        %s1859 = scalar_lea.vmem [#allocation10], %s1858
        // Predicated region
        $region61: #{tpu_custom_call.1} parent=43 // pred_check
          %p1860 = pneg %p174
        $region62: #{tpu_custom_call.1} parent=43 // pred_check_branch
          %1862 = sbr.rel (%p1860) target = $region64
        $region63: #{tpu_custom_call.1} parent=43 // pred_region
          %s1863 = smul.u32 4, %s25
          %1865 = vsyncadd %s1856, 0
          %s1866 = smul.addr %s1863, 2
          %s1867 = smul.addr %s1866, 8
          %s1868 = scalar_lea.hbm %s6, %s1867
          %s1869 = sshll.u32 %s1859, 4
          %s1870 = int_to_ptr.vmem [resolvable:$true] %s1869
          %s1871 = sshll.u32 %s1868, 4
          %s1872 = int_to_ptr.hbm [resolvable:$true] %s1871
          %1877 = dma.vmem_to_hbm [thread:$0]  %s1870, 1024, %s1872, %s1856, 128, 128, 8
        $region64: #{tpu_custom_call.1} parent=43 // pred_fallthru
          _
      $region44: #{tpu_custom_call.1} parent=5 // pred_fallthru
        _
      %p1878 = scmp.le.s32.totalorder 2, %s20
      // Predicated region
      $region65: #{tpu_custom_call.1} parent=5 // pred_check
        %p1879 = pneg %p1878
      $region66: #{tpu_custom_call.1} parent=5 // pred_check_branch
        %1881 = sbr.rel (%p1879) target = $region68
      $region67: #{tpu_custom_call.1} parent=5 // pred_region
        %s1882 = ssub.s32 %s20, 2
        // Predicated region
        $region69: #{tpu_custom_call.1} parent=67 // pred_check
          %p1883 = pneg %p180
        $region70: #{tpu_custom_call.1} parent=67 // pred_check_branch
          %1885 = sbr.rel (%p1883) target = $region72
        $region71: #{tpu_custom_call.1} parent=67 // pred_region
          %s1886 = sand.u32 %s165, 1
          %s1887 = scalar_lea.sflag [#allocation4], %s1886
          %s1888 = sand.u32 %s165, 1
          %s1889 = smul.addr %s1888, 64
          %s1890 = scalar_lea.vmem [#allocation10], %s1889
          %1892 = dma.done %s1887, 1024
        $region72: #{tpu_custom_call.1} parent=67 // pred_fallthru
          _
      $region68: #{tpu_custom_call.1} parent=5 // pred_fallthru
        _
    $region6: #{tpu_custom_call.1} parent=1 // loop_footer
      %s24 = sadd.s32 1, %s20
    $region7: #{tpu_custom_call.1} parent=1 // loop_footer_branch
      %19 = sbr.rel target = $region3
    $region8: #{tpu_custom_call.1} parent=1 // loop_exit
      _
    %1893 = vsyncpa [#allocation3], 1
    %s1894 = scalar_lea.sflag [#allocation3], 1
    %1895 = vsyncpa %s1894, 1
    %1896 = vsyncpa [#allocation6], 1
    %1897 = vsyncpa [#allocation9], 1
    %1898 = vsyncpa [#allocation4], 1
    %s1899 = scalar_lea.sflag [#allocation4], 1
    %1900 = vsyncpa %s1899, 1

</llo_original>
